<compile_context>
chip_gen: v7x
topology: tpu7x:2x2x1
jax: 0.10.0
libtpu: 0.0.40
codegen_flags: <defaults>
</compile_context>

<pallas_src>
import math

import jax
import jax.numpy as jnp
from jax import lax
from jax.experimental import pallas as pl
from jax.experimental.pallas import tpu as pltpu

# ----------------------------- model dims -----------------------------
C, H, W = 3, 16, 16            # input image (CHW)
P = 4                          # patch size
NP = (H // P) * (W // P)       # 16 patches
T = NP + 1                     # +1 CLS token -> 17 tokens
T_PAD = 24                     # token axis padded to a sublane multiple
B = 2                          # both images processed in one kernel
TT = B * T_PAD                 # 48 stacked token rows
D = 32                         # hidden size (synthetic stand-in for 768)
HEADS = 2
HD = D // HEADS
MLP = 4 * D                    # 128 (lane-dense)
PATCH_DIM = C * P * P          # 48
NEG_INF = -1e9
BIG = 3.0e38

# packed-constant slab layout (all offsets 8-sublane / 128-lane aligned)
ROW_BQKV, ROW_BO, ROW_B1, ROW_B2, ROW_LN, CONST_ROWS = 48, 56, 64, 72, 80, 88
COL_QKV, COL_W1, COL_WO, WROW_LANES = 0, 128, 256, 384


def _fullspec(shape):
    nd = len(shape)
    return pl.BlockSpec(shape, lambda *_: (0,) * nd)


# --------------------------- exact GELU (erf) ---------------------------
def _erf(x):
    # Abramowitz & Stegun 7.1.26 rational approximation (|err| < 1.5e-7).
    # The divide is done on the EUP (separate VLIW slot) via pl.reciprocal.
    a1, a2, a3, a4, a5 = 0.254829592, -0.284496736, 1.421413741, -1.453152027, 1.061405429
    p = 0.3275911
    sgn = jnp.where(x >= 0.0, 1.0, -1.0)
    ax = jnp.abs(x)
    t = pl.reciprocal(1.0 + p * ax, approx=True)
    poly = ((((a5 * t + a4) * t + a3) * t + a2) * t + a1) * t
    return sgn * (1.0 - poly * jnp.exp(-ax * ax))


def _gelu_exact(x):
    return 0.5 * x * (1.0 + _erf(x * (1.0 / math.sqrt(2.0))))


def _newton_recip(x):
    """EUP approx reciprocal + one Newton step (near-exact, tiny operands only)."""
    r = pl.reciprocal(x, approx=True)
    return r * (2.0 - x * r)


# ------------------------------ the kernel ------------------------------
def dino_kernel(patches_ref, wemb_ref, wrow_ref, w2_ref, consts_ref, out_ref):
    f32 = jnp.float32

    # Cheap (TT,1) column masks (hoisting these to an input would need
    # lane-extraction relayouts; a single-column iota + compares is cheaper).
    row = lax.broadcasted_iota(jnp.int32, (TT, 1), 0)
    tok = jnp.where(row < T_PAD, row, row - T_PAD)
    patch_valid = (tok >= 1) & (tok < 1 + NP)            # rows holding real patches
    is_img1 = row >= T_PAD

    # ---- preprocess: per-image global min/max rescale to [0,1] ----
    x = patches_ref[...]                                                  # (TT, PATCH_DIM)
    row_min = jnp.min(jnp.where(patch_valid, x, BIG), axis=-1, keepdims=True)
    row_max = jnp.max(jnp.where(patch_valid, x, -BIG), axis=-1, keepdims=True)
    mn0 = jnp.min(row_min[:T_PAD])
    mn1 = jnp.min(row_min[T_PAD:])
    mx0 = jnp.max(row_max[:T_PAD])
    mx1 = jnp.max(row_max[T_PAD:])
    mn_row = jnp.where(is_img1, mn1, mn0)                                 # (TT,1)
    mx_row = jnp.where(is_img1, mx1, mx0)
    # NOTE: 1e-12 floor differs from the reference's divide-by-zero for a
    # constant image (intended guard).
    rng = jnp.maximum(mx_row - mn_row, 1e-12)
    inv_range = _newton_recip(rng)
    x01 = jnp.where(patch_valid, (x - mn_row) * inv_range, 0.0)           # zero CLS/pad rows

    # ---- packed constants (static, tile-aligned slices — no rebase) ----
    attn_bias = consts_ref[0:TT, 0:TT]                                    # (TT, TT)
    bqkv = consts_ref[ROW_BQKV:ROW_BQKV + 1, 0:3 * D]                     # (1, 3D)
    bo = consts_ref[ROW_BO:ROW_BO + 1, 0:D]                               # (1, D)
    b1 = consts_ref[ROW_B1:ROW_B1 + 1, 0:MLP]                             # (1, MLP)
    b2 = consts_ref[ROW_B2:ROW_B2 + 1, 0:D]                               # (1, D)
    ln = consts_ref[ROW_LN:ROW_LN + 6, 0:D]                               # (6, D)

    w_eff = wemb_ref[0:PATCH_DIM, :]                                      # (PATCH_DIM, D)
    tokbias = wemb_ref[PATCH_DIM:PATCH_DIM + TT, :]                       # (TT, D)
    wqkv = wrow_ref[:, COL_QKV:COL_QKV + 3 * D]                           # (D, 3D)
    w1 = wrow_ref[:, COL_W1:COL_W1 + MLP]                                 # (D, MLP)
    wo = wrow_ref[:, COL_WO:COL_WO + D]                                   # (D, D)

    # ---- patch embed; CLS/pos/processor-normalization folded into tokbias ----
    tokens = jnp.dot(x01, w_eff, preferred_element_type=f32) + tokbias    # (TT, D)

    def layernorm(xx, g, b):
        # E[x^2] - mu^2 form: the two lane reductions are independent.
        mu = jnp.mean(xx, axis=-1, keepdims=True)
        ex2 = jnp.mean(xx * xx, axis=-1, keepdims=True)
        var = ex2 - mu * mu
        return (xx - mu) * lax.rsqrt(var + 1e-6) * g + b

    # ---- multi-head self-attention ----
    h = layernorm(tokens, ln[0:1, :], ln[1:2, :])
    qkv = jnp.dot(h, wqkv, preferred_element_type=f32) + bqkv             # (TT, 3D)

    scale = 1.0 / math.sqrt(HD)
    heads = []
    for hh in range(HEADS):                                               # unrolled
        q = qkv[:, hh * HD:(hh + 1) * HD]
        k = qkv[:, D + hh * HD:D + (hh + 1) * HD]
        v = qkv[:, 2 * D + hh * HD:2 * D + (hh + 1) * HD]
        # q @ k^T without an explicit transpose (contract last dims).
        s = lax.dot_general(q, k, (((1,), (1,)), ((), ())),
                            preferred_element_type=f32) * scale + attn_bias
        s = s - jnp.max(s, axis=-1, keepdims=True)
        pexp = jnp.exp(s)
        den = jnp.sum(pexp, axis=-1, keepdims=True)                       # (TT,1)
        pexp = pexp * _newton_recip(den)                                  # rows sum ~1
        heads.append(jnp.dot(pexp, v, preferred_element_type=f32))        # (TT, HD)
    # single fused K=32 output projection instead of two K=16 matmuls + add
    attn = jnp.dot(jnp.concatenate(heads, axis=-1), wo,
                   preferred_element_type=f32)
    xres = tokens + attn + bo

    # ---- MLP with exact (erf) GELU ----
    h = layernorm(xres, ln[2:3, :], ln[3:4, :])
    h = jnp.dot(h, w1, preferred_element_type=f32) + b1
    h = _gelu_exact(h)
    xres = xres + jnp.dot(h, w2_ref[...], preferred_element_type=f32) + b2

    # ---- final layernorm (DINOv2 last_hidden_state) ----
    feat = layernorm(xres, ln[4:5, :], ln[5:6, :])                        # (TT, D)

    # ---- per-token L2-normalize, cosine sim, masked mean, (m+1)/2 ----
    f0 = feat[:T_PAD, :]
    f1 = feat[T_PAD:, :]
    inv_n0 = lax.rsqrt(jnp.sum(f0 * f0, axis=-1, keepdims=True) + 1e-12)
    inv_n1 = lax.rsqrt(jnp.sum(f1 * f1, axis=-1, keepdims=True) + 1e-12)
    cos = jnp.sum((f0 * inv_n0) * (f1 * inv_n1), axis=-1, keepdims=True)  # (T_PAD,1)
    vmask = (lax.broadcasted_iota(jnp.int32, (T_PAD, 1), 0) < T).astype(f32)
    m = jnp.sum(cos * vmask) * (1.0 / T)                                  # mean over 17 tokens
    out_ref[...] = ((m + 1.0) * 0.5) * jnp.ones((1, 1), f32)


# --------------------------- params & packing ----------------------------
def init_params(key):
    ks = jax.random.split(key, 16)
    s = 0.02

    def rnd(k, shape):
        return (s * jax.random.normal(k, shape)).astype(jnp.float32)

    w_patch = rnd(ks[0], (PATCH_DIM, D))
    b_patch = rnd(ks[1], (1, D))
    cls = rnd(ks[2], (1, D))
    pos = rnd(ks[3], (T, D))

    # dinov2 processor normalization (ImageNet mean/std), expanded to the
    # channel-major im2col layout and folded into the patch-embed weight.
    # NOTE: the module's registered CLIP mean/std buffers are never used in forward().
    mean_c = jnp.array([0.485, 0.456, 0.406], jnp.float32)
    std_c = jnp.array([0.229, 0.224, 0.225], jnp.float32)
    mean_patch = jnp.repeat(mean_c, P * P)                                # (PATCH_DIM,)
    inv_std_patch = jnp.repeat(1.0 / std_c, P * P)
    w_eff = w_patch * inv_std_patch[:, None]
    b_fold = -(mean_patch[None, :] @ w_eff)                               # (1, D)

    # token bias: CLS+pos0 in row 0, pos+patch-bias+fold in rows 1..T-1, zero pad.
    tok_bias_one = jnp.zeros((T_PAD, D), jnp.float32)
    tok_bias_one = tok_bias_one.at[0:1, :].set(cls + pos[0:1, :])
    tok_bias_one = tok_bias_one.at[1:T, :].set(pos[1:, :] + b_patch + b_fold)
    token_bias = jnp.concatenate([tok_bias_one, tok_bias_one], axis=0)    # (TT, D)

    wq, wk, wv = rnd(ks[4], (D, D)), rnd(ks[5], (D, D)), rnd(ks[6], (D, D))
    wqkv = jnp.concatenate([wq, wk, wv], axis=1)                          # (D, 3D)
    bqkv = jnp.concatenate([rnd(ks[7], (1, D)), rnd(ks[8], (1, D)),
                            rnd(ks[9], (1, D))], axis=1)                  # (1, 3D)
    wo, bo = rnd(ks[10], (D, D)), rnd(ks[11], (1, D))
    w1, b1 = rnd(ks[12], (D, MLP)), rnd(ks[13], (1, MLP))
    w2, b2 = rnd(ks[14], (MLP, D)), rnd(ks[15], (1, D))

    ln = jnp.concatenate([jnp.ones((1, D)), jnp.zeros((1, D))] * 3,
                         axis=0).astype(jnp.float32)                      # (6, D)

    # Host-side block-diagonal additive attention mask (keys: same image & < T).
    ridx = jnp.arange(TT)
    cidx = jnp.arange(TT)
    same_img = (ridx[:, None] < T_PAD) == (cidx[None, :] < T_PAD)
    col_in_img = jnp.where(cidx < T_PAD, cidx, cidx - T_PAD)
    key_ok = same_img & (col_in_img[None, :] < T)
    attn_bias = jnp.where(key_ok, 0.0, NEG_INF).astype(jnp.float32)       # (TT, TT)

    # ---- pack into a few lane-dense slabs (5 kernel inputs total) ----
    wemb = jnp.concatenate([w_eff, token_bias], axis=0)                   # (96, D)

    wrow = jnp.zeros((D, WROW_LANES), jnp.float32)                        # (D, 384)
    wrow = wrow.at[:, COL_QKV:COL_QKV + 3 * D].set(wqkv)
    wrow = wrow.at[:, COL_W1:COL_W1 + MLP].set(w1)
    wrow = wrow.at[:, COL_WO:COL_WO + D].set(wo)

    consts = jnp.zeros((CONST_ROWS, 128), jnp.float32)                    # (88, 128)
    consts = consts.at[0:TT, 0:TT].set(attn_bias)
    consts = consts.at[ROW_BQKV, 0:3 * D].set(bqkv[0])
    consts = consts.at[ROW_BO, 0:D].set(bo[0])
    consts = consts.at[ROW_B1, 0:MLP].set(b1[0])
    consts = consts.at[ROW_B2, 0:D].set(b2[0])
    consts = consts.at[ROW_LN:ROW_LN + 6, 0:D].set(ln)

    return {"wemb": wemb, "wrow": wrow, "w2": w2, "consts": consts}


def _im2col_padded(image):
    """(C,H,W) -> (T_PAD, PATCH_DIM): row 0 (CLS slot) and rows T..T_PAD-1 are zero."""
    patches = (image.reshape(C, H // P, P, W // P, P)
                    .transpose(1, 3, 0, 2, 4)
                    .reshape(NP, PATCH_DIM))
    return jnp.pad(patches, ((1, T_PAD - T), (0, 0)))


def dino_similarity(image_0, image_1, params):
    # Both images stacked on the sublane (token) axis; one fused kernel does the rest.
    patches = jnp.concatenate([_im2col_padded(image_0), _im2col_padded(image_1)],
                              axis=0)                                     # (TT, PATCH_DIM)
    args = (patches, params["wemb"], params["wrow"], params["w2"], params["consts"])
    out = pl.pallas_call(
        dino_kernel,
        out_shape=jax.ShapeDtypeStruct((1, 1), jnp.float32),
        grid=(1,),
        in_specs=[_fullspec(a.shape) for a in args],
        out_specs=_fullspec((1, 1)),
        compiler_params=pltpu.CompilerParams(dimension_semantics=("arbitrary",)),
    )(*args)
    return out[0, 0]


# ------------------------------- main -----------------------------------
if __name__ == "__main__":
    key = jax.random.PRNGKey(0)
    k0, k1 = jax.random.split(key)
    image_0 = jax.random.normal(k0, (C, H, W), dtype=jnp.float32)
    image_1 = jax.random.normal(k1, (C, H, W), dtype=jnp.float32)

    params = init_params(jax.random.PRNGKey(42))

    sim = jax.jit(dino_similarity)(image_0, image_1, params)
    sim = jax.block_until_ready(sim)
    assert sim.shape == () and jnp.isfinite(sim)
    print("KERNEL_OK")
</pallas_src>

<mosaic_0001>
module attributes {stable_mosaic.version = 11 : i64} {
  func.func @dino_kernel(%arg0: i32, %arg1: memref<48x48xf32, #tpu.memory_space<vmem>>, %arg2: memref<96x32xf32, #tpu.memory_space<vmem>>, %arg3: memref<32x384xf32, #tpu.memory_space<vmem>>, %arg4: memref<128x32xf32, #tpu.memory_space<vmem>>, %arg5: memref<88x128xf32, #tpu.memory_space<vmem>>, %arg6: memref<1x1xf32, #tpu.memory_space<vmem>>) attributes {dimension_semantics = [#tpu.dimension_semantics<arbitrary>], iteration_bounds = array<i64: 1>, scalar_prefetch = 0 : i64, scratch_operands = 0 : i64, tpu.core_type = #tpu.core_type<tc>, window_params = [{pipeline_mode = #tpu.pipeline_mode<synchronous>, transform_indices = @transform_0, window_bounds = array<i64: 48, 48>}, {pipeline_mode = #tpu.pipeline_mode<synchronous>, transform_indices = @transform_1, window_bounds = array<i64: 96, 32>}, {pipeline_mode = #tpu.pipeline_mode<synchronous>, transform_indices = @transform_2, window_bounds = array<i64: 32, 384>}, {pipeline_mode = #tpu.pipeline_mode<synchronous>, transform_indices = @transform_3, window_bounds = array<i64: 128, 32>}, {pipeline_mode = #tpu.pipeline_mode<synchronous>, transform_indices = @transform_4, window_bounds = array<i64: 88, 128>}, {pipeline_mode = #tpu.pipeline_mode<synchronous>, transform_indices = @transform_5, window_bounds = array<i64: 1, 1>}]} {
    %0 = tpu.iota {dimensions = array<i32: 0>} : vector<48x1xi32>
    %c24_i32 = arith.constant 24 : i32
    %1 = vector.broadcast %c24_i32 : i32 to vector<48x1xi32>
    %2 = arith.cmpi slt, %0, %1 : vector<48x1xi32>
    %c24_i32_0 = arith.constant 24 : i32
    %3 = vector.broadcast %c24_i32_0 : i32 to vector<48x1xi32>
    %4 = arith.subi %0, %3 : vector<48x1xi32>
    %5 = arith.select %2, %0, %4 : vector<48x1xi1>, vector<48x1xi32>
    %c1_i32 = arith.constant 1 : i32
    %6 = vector.broadcast %c1_i32 : i32 to vector<48x1xi32>
    %7 = arith.cmpi sge, %5, %6 : vector<48x1xi32>
    %c17_i32 = arith.constant 17 : i32
    %8 = vector.broadcast %c17_i32 : i32 to vector<48x1xi32>
    %9 = arith.cmpi slt, %5, %8 : vector<48x1xi32>
    %10 = arith.andi %7, %9 : vector<48x1xi1>
    %c24_i32_1 = arith.constant 24 : i32
    %11 = vector.broadcast %c24_i32_1 : i32 to vector<48x1xi32>
    %12 = arith.cmpi sge, %0, %11 : vector<48x1xi32>
    %c0 = arith.constant 0 : index
    %c0_2 = arith.constant 0 : index
    %13 = vector.load %arg1[%c0, %c0_2] : memref<48x48xf32, #tpu.memory_space<vmem>>, vector<48x48xf32>
    %cst = arith.constant 3.000000e+38 : f32
    %14 = vector.shape_cast %10 : vector<48x1xi1> to vector<48x1xi1>
    %15 = vector.broadcast %14 : vector<48x1xi1> to vector<48x48xi1>
    %16 = vector.broadcast %cst : f32 to vector<48x48xf32>
    %17 = arith.select %15, %13, %16 : vector<48x48xi1>, vector<48x48xf32>
    %cst_3 = arith.constant dense<0x7F800000> : vector<48xf32>
    %18 = vector.multi_reduction <minimumf>, %17, %cst_3 [1] : vector<48x48xf32> to vector<48xf32>
    %19 = vector.shape_cast %18 : vector<48xf32> to vector<48x1xf32>
    %cst_4 = arith.constant -3.000000e+38 : f32
    %20 = vector.shape_cast %10 : vector<48x1xi1> to vector<48x1xi1>
    %21 = vector.broadcast %20 : vector<48x1xi1> to vector<48x48xi1>
    %22 = vector.broadcast %cst_4 : f32 to vector<48x48xf32>
    %23 = arith.select %21, %13, %22 : vector<48x48xi1>, vector<48x48xf32>
    %cst_5 = arith.constant dense<0xFF800000> : vector<48xf32>
    %24 = vector.multi_reduction <maximumf>, %23, %cst_5 [1] : vector<48x48xf32> to vector<48xf32>
    %25 = vector.shape_cast %24 : vector<48xf32> to vector<48x1xf32>
    %26 = vector.extract_strided_slice %19 {offsets = [0, 0], sizes = [24, 1], strides = [1, 1]} : vector<48x1xf32> to vector<24x1xf32>
    %27 = vector.shape_cast %26 : vector<24x1xf32> to vector<1x24x1xf32>
    %cst_6 = arith.constant dense<0x7F800000> : vector<1xf32>
    %28 = vector.multi_reduction <minimumf>, %27, %cst_6 [1, 2] : vector<1x24x1xf32> to vector<1xf32>
    %29 = vector.shape_cast %28 : vector<1xf32> to vector<1x1x1xf32>
    %30 = vector.extract %29[0, 0, 0] : f32 from vector<1x1x1xf32>
    %31 = vector.extract_strided_slice %19 {offsets = [24, 0], sizes = [24, 1], strides = [1, 1]} : vector<48x1xf32> to vector<24x1xf32>
    %32 = vector.shape_cast %31 : vector<24x1xf32> to vector<1x24x1xf32>
    %cst_7 = arith.constant dense<0x7F800000> : vector<1xf32>
    %33 = vector.multi_reduction <minimumf>, %32, %cst_7 [1, 2] : vector<1x24x1xf32> to vector<1xf32>
    %34 = vector.shape_cast %33 : vector<1xf32> to vector<1x1x1xf32>
    %35 = vector.extract %34[0, 0, 0] : f32 from vector<1x1x1xf32>
    %36 = vector.extract_strided_slice %25 {offsets = [0, 0], sizes = [24, 1], strides = [1, 1]} : vector<48x1xf32> to vector<24x1xf32>
    %37 = vector.shape_cast %36 : vector<24x1xf32> to vector<1x24x1xf32>
    %cst_8 = arith.constant dense<0xFF800000> : vector<1xf32>
    %38 = vector.multi_reduction <maximumf>, %37, %cst_8 [1, 2] : vector<1x24x1xf32> to vector<1xf32>
    %39 = vector.shape_cast %38 : vector<1xf32> to vector<1x1x1xf32>
    %40 = vector.extract %39[0, 0, 0] : f32 from vector<1x1x1xf32>
    %41 = vector.extract_strided_slice %25 {offsets = [24, 0], sizes = [24, 1], strides = [1, 1]} : vector<48x1xf32> to vector<24x1xf32>
    %42 = vector.shape_cast %41 : vector<24x1xf32> to vector<1x24x1xf32>
    %cst_9 = arith.constant dense<0xFF800000> : vector<1xf32>
    %43 = vector.multi_reduction <maximumf>, %42, %cst_9 [1, 2] : vector<1x24x1xf32> to vector<1xf32>
    %44 = vector.shape_cast %43 : vector<1xf32> to vector<1x1x1xf32>
    %45 = vector.extract %44[0, 0, 0] : f32 from vector<1x1x1xf32>
    %46 = vector.broadcast %35 : f32 to vector<48x1xf32>
    %47 = vector.broadcast %30 : f32 to vector<48x1xf32>
    %48 = arith.select %12, %46, %47 : vector<48x1xi1>, vector<48x1xf32>
    %49 = vector.broadcast %45 : f32 to vector<48x1xf32>
    %50 = vector.broadcast %40 : f32 to vector<48x1xf32>
    %51 = arith.select %12, %49, %50 : vector<48x1xi1>, vector<48x1xf32>
    %52 = arith.subf %51, %48 : vector<48x1xf32>
    %cst_10 = arith.constant 9.99999996E-13 : f32
    %53 = vector.broadcast %cst_10 : f32 to vector<48x1xf32>
    %54 = arith.maximumf %52, %53 : vector<48x1xf32>
    %55 = tpu.reciprocal %54 {approx = true} : vector<48x1xf32> -> vector<48x1xf32>
    %56 = arith.mulf %54, %55 : vector<48x1xf32>
    %cst_11 = arith.constant 2.000000e+00 : f32
    %57 = vector.broadcast %cst_11 : f32 to vector<48x1xf32>
    %58 = arith.subf %57, %56 : vector<48x1xf32>
    %59 = arith.mulf %55, %58 : vector<48x1xf32>
    %60 = vector.broadcast %48 : vector<48x1xf32> to vector<48x48xf32>
    %61 = arith.subf %13, %60 : vector<48x48xf32>
    %62 = vector.broadcast %59 : vector<48x1xf32> to vector<48x48xf32>
    %63 = arith.mulf %61, %62 : vector<48x48xf32>
    %cst_12 = arith.constant 0.000000e+00 : f32
    %64 = vector.shape_cast %10 : vector<48x1xi1> to vector<48x1xi1>
    %65 = vector.broadcast %64 : vector<48x1xi1> to vector<48x48xi1>
    %66 = vector.broadcast %cst_12 : f32 to vector<48x48xf32>
    %67 = arith.select %65, %63, %66 : vector<48x48xi1>, vector<48x48xf32>
    %c0_13 = arith.constant 0 : index
    %c0_14 = arith.constant 0 : index
    %68 = vector.load %arg5[%c0_13, %c0_14] : memref<88x128xf32, #tpu.memory_space<vmem>>, vector<48x48xf32>
    %c48 = arith.constant 48 : index
    %c0_15 = arith.constant 0 : index
    %69 = vector.load %arg5[%c48, %c0_15] : memref<88x128xf32, #tpu.memory_space<vmem>>, vector<1x96xf32>
    %c56 = arith.constant 56 : index
    %c0_16 = arith.constant 0 : index
    %70 = vector.load %arg5[%c56, %c0_16] : memref<88x128xf32, #tpu.memory_space<vmem>>, vector<1x32xf32>
    %c64 = arith.constant 64 : index
    %c0_17 = arith.constant 0 : index
    %71 = vector.load %arg5[%c64, %c0_17] : memref<88x128xf32, #tpu.memory_space<vmem>>, vector<1x128xf32>
    %c72 = arith.constant 72 : index
    %c0_18 = arith.constant 0 : index
    %72 = vector.load %arg5[%c72, %c0_18] : memref<88x128xf32, #tpu.memory_space<vmem>>, vector<1x32xf32>
    %c80 = arith.constant 80 : index
    %c0_19 = arith.constant 0 : index
    %73 = vector.load %arg5[%c80, %c0_19] : memref<88x128xf32, #tpu.memory_space<vmem>>, vector<6x32xf32>
    %c0_20 = arith.constant 0 : index
    %c0_21 = arith.constant 0 : index
    %74 = vector.load %arg2[%c0_20, %c0_21] : memref<96x32xf32, #tpu.memory_space<vmem>>, vector<48x32xf32>
    %c48_22 = arith.constant 48 : index
    %c0_23 = arith.constant 0 : index
    %75 = vector.load %arg2[%c48_22, %c0_23] : memref<96x32xf32, #tpu.memory_space<vmem>>, vector<48x32xf32>
    %c0_24 = arith.constant 0 : index
    %c0_25 = arith.constant 0 : index
    %76 = vector.load %arg3[%c0_24, %c0_25] : memref<32x384xf32, #tpu.memory_space<vmem>>, vector<32x96xf32>
    %c0_26 = arith.constant 0 : index
    %c128 = arith.constant 128 : index
    %77 = vector.load %arg3[%c0_26, %c128] : memref<32x384xf32, #tpu.memory_space<vmem>>, vector<32x128xf32>
    %c0_27 = arith.constant 0 : index
    %c256 = arith.constant 256 : index
    %78 = vector.load %arg3[%c0_27, %c256] : memref<32x384xf32, #tpu.memory_space<vmem>>, vector<32x32xf32>
    %cst_28 = arith.constant dense<0.000000e+00> : vector<48x32xf32>
    %79 = tpu.matmul %67, %74, %cst_28 {dimension_numbers = #tpu.dot_dimension_numbers<[1], [0], [0], [1], [0, 0, 1, 1], [], []>} : vector<48x48xf32>, vector<48x32xf32>, vector<48x32xf32> -> vector<48x32xf32>
    %80 = arith.addf %79, %75 : vector<48x32xf32>
    %81 = vector.extract_strided_slice %73 {offsets = [0, 0], sizes = [1, 32], strides = [1, 1]} : vector<6x32xf32> to vector<1x32xf32>
    %82 = vector.extract_strided_slice %73 {offsets = [1, 0], sizes = [1, 32], strides = [1, 1]} : vector<6x32xf32> to vector<1x32xf32>
    %cst_29 = arith.constant dense<0.000000e+00> : vector<48xf32>
    %83 = vector.multi_reduction <add>, %80, %cst_29 [1] : vector<48x32xf32> to vector<48xf32>
    %84 = vector.shape_cast %83 : vector<48xf32> to vector<48x1xf32>
    %cst_30 = arith.constant 3.200000e+01 : f32
    %85 = vector.broadcast %cst_30 : f32 to vector<48x1xf32>
    %86 = arith.divf %84, %85 : vector<48x1xf32>
    %87 = arith.mulf %80, %80 : vector<48x32xf32>
    %cst_31 = arith.constant dense<0.000000e+00> : vector<48xf32>
    %88 = vector.multi_reduction <add>, %87, %cst_31 [1] : vector<48x32xf32> to vector<48xf32>
    %89 = vector.shape_cast %88 : vector<48xf32> to vector<48x1xf32>
    %cst_32 = arith.constant 3.200000e+01 : f32
    %90 = vector.broadcast %cst_32 : f32 to vector<48x1xf32>
    %91 = arith.divf %89, %90 : vector<48x1xf32>
    %92 = arith.mulf %86, %86 : vector<48x1xf32>
    %93 = arith.subf %91, %92 : vector<48x1xf32>
    %94 = vector.broadcast %86 : vector<48x1xf32> to vector<48x32xf32>
    %95 = arith.subf %80, %94 : vector<48x32xf32>
    %cst_33 = arith.constant 9.99999997E-7 : f32
    %96 = vector.broadcast %cst_33 : f32 to vector<48x1xf32>
    %97 = arith.addf %93, %96 : vector<48x1xf32>
    %98 = math.rsqrt %97 : vector<48x1xf32>
    %99 = vector.broadcast %98 : vector<48x1xf32> to vector<48x32xf32>
    %100 = arith.mulf %95, %99 : vector<48x32xf32>
    %101 = vector.broadcast %81 : vector<1x32xf32> to vector<48x32xf32>
    %102 = arith.mulf %100, %101 : vector<48x32xf32>
    %103 = vector.broadcast %82 : vector<1x32xf32> to vector<48x32xf32>
    %104 = arith.addf %102, %103 : vector<48x32xf32>
    %cst_34 = arith.constant dense<0.000000e+00> : vector<48x96xf32>
    %105 = tpu.matmul %104, %76, %cst_34 {dimension_numbers = #tpu.dot_dimension_numbers<[1], [0], [0], [1], [0, 0, 1, 1], [], []>} : vector<48x32xf32>, vector<32x96xf32>, vector<48x96xf32> -> vector<48x96xf32>
    %106 = vector.broadcast %69 : vector<1x96xf32> to vector<48x96xf32>
    %107 = arith.addf %105, %106 : vector<48x96xf32>
    %108 = vector.extract_strided_slice %107 {offsets = [0, 0], sizes = [48, 16], strides = [1, 1]} : vector<48x96xf32> to vector<48x16xf32>
    %109 = vector.extract_strided_slice %107 {offsets = [0, 32], sizes = [48, 16], strides = [1, 1]} : vector<48x96xf32> to vector<48x16xf32>
    %110 = vector.extract_strided_slice %107 {offsets = [0, 64], sizes = [48, 16], strides = [1, 1]} : vector<48x96xf32> to vector<48x16xf32>
    %cst_35 = arith.constant dense<0.000000e+00> : vector<48x48xf32>
    %111 = tpu.matmul %108, %109, %cst_35 {dimension_numbers = #tpu.dot_dimension_numbers<[1], [1], [0], [0], [0, 0, 1, 0], [], []>} : vector<48x16xf32>, vector<48x16xf32>, vector<48x48xf32> -> vector<48x48xf32>
    %cst_36 = arith.constant 2.500000e-01 : f32
    %112 = vector.broadcast %cst_36 : f32 to vector<48x48xf32>
    %113 = arith.mulf %111, %112 : vector<48x48xf32>
    %114 = arith.addf %113, %68 : vector<48x48xf32>
    %cst_37 = arith.constant dense<0xFF800000> : vector<48xf32>
    %115 = vector.multi_reduction <maximumf>, %114, %cst_37 [1] : vector<48x48xf32> to vector<48xf32>
    %116 = vector.shape_cast %115 : vector<48xf32> to vector<48x1xf32>
    %117 = vector.broadcast %116 : vector<48x1xf32> to vector<48x48xf32>
    %118 = arith.subf %114, %117 : vector<48x48xf32>
    %119 = math.exp %118 : vector<48x48xf32>
    %cst_38 = arith.constant dense<0.000000e+00> : vector<48xf32>
    %120 = vector.multi_reduction <add>, %119, %cst_38 [1] : vector<48x48xf32> to vector<48xf32>
    %121 = vector.shape_cast %120 : vector<48xf32> to vector<48x1xf32>
    %122 = tpu.reciprocal %121 {approx = true} : vector<48x1xf32> -> vector<48x1xf32>
    %123 = arith.mulf %121, %122 : vector<48x1xf32>
    %cst_39 = arith.constant 2.000000e+00 : f32
    %124 = vector.broadcast %cst_39 : f32 to vector<48x1xf32>
    %125 = arith.subf %124, %123 : vector<48x1xf32>
    %126 = arith.mulf %122, %125 : vector<48x1xf32>
    %127 = vector.broadcast %126 : vector<48x1xf32> to vector<48x48xf32>
    %128 = arith.mulf %119, %127 : vector<48x48xf32>
    %cst_40 = arith.constant dense<0.000000e+00> : vector<48x16xf32>
    %129 = tpu.matmul %128, %110, %cst_40 {dimension_numbers = #tpu.dot_dimension_numbers<[1], [0], [0], [1], [0, 0, 1, 1], [], []>} : vector<48x48xf32>, vector<48x16xf32>, vector<48x16xf32> -> vector<48x16xf32>
    %130 = vector.extract_strided_slice %107 {offsets = [0, 16], sizes = [48, 16], strides = [1, 1]} : vector<48x96xf32> to vector<48x16xf32>
    %131 = vector.extract_strided_slice %107 {offsets = [0, 48], sizes = [48, 16], strides = [1, 1]} : vector<48x96xf32> to vector<48x16xf32>
    %132 = vector.extract_strided_slice %107 {offsets = [0, 80], sizes = [48, 16], strides = [1, 1]} : vector<48x96xf32> to vector<48x16xf32>
    %cst_41 = arith.constant dense<0.000000e+00> : vector<48x48xf32>
    %133 = tpu.matmul %130, %131, %cst_41 {dimension_numbers = #tpu.dot_dimension_numbers<[1], [1], [0], [0], [0, 0, 1, 0], [], []>} : vector<48x16xf32>, vector<48x16xf32>, vector<48x48xf32> -> vector<48x48xf32>
    %cst_42 = arith.constant 2.500000e-01 : f32
    %134 = vector.broadcast %cst_42 : f32 to vector<48x48xf32>
    %135 = arith.mulf %133, %134 : vector<48x48xf32>
    %136 = arith.addf %135, %68 : vector<48x48xf32>
    %cst_43 = arith.constant dense<0xFF800000> : vector<48xf32>
    %137 = vector.multi_reduction <maximumf>, %136, %cst_43 [1] : vector<48x48xf32> to vector<48xf32>
    %138 = vector.shape_cast %137 : vector<48xf32> to vector<48x1xf32>
    %139 = vector.broadcast %138 : vector<48x1xf32> to vector<48x48xf32>
    %140 = arith.subf %136, %139 : vector<48x48xf32>
    %141 = math.exp %140 : vector<48x48xf32>
    %cst_44 = arith.constant dense<0.000000e+00> : vector<48xf32>
    %142 = vector.multi_reduction <add>, %141, %cst_44 [1] : vector<48x48xf32> to vector<48xf32>
    %143 = vector.shape_cast %142 : vector<48xf32> to vector<48x1xf32>
    %144 = tpu.reciprocal %143 {approx = true} : vector<48x1xf32> -> vector<48x1xf32>
    %145 = arith.mulf %143, %144 : vector<48x1xf32>
    %cst_45 = arith.constant 2.000000e+00 : f32
    %146 = vector.broadcast %cst_45 : f32 to vector<48x1xf32>
    %147 = arith.subf %146, %145 : vector<48x1xf32>
    %148 = arith.mulf %144, %147 : vector<48x1xf32>
    %149 = vector.broadcast %148 : vector<48x1xf32> to vector<48x48xf32>
    %150 = arith.mulf %141, %149 : vector<48x48xf32>
    %cst_46 = arith.constant dense<0.000000e+00> : vector<48x16xf32>
    %151 = tpu.matmul %150, %132, %cst_46 {dimension_numbers = #tpu.dot_dimension_numbers<[1], [0], [0], [1], [0, 0, 1, 1], [], []>} : vector<48x48xf32>, vector<48x16xf32>, vector<48x16xf32> -> vector<48x16xf32>
    %152 = tpu.concatenate %129, %151 in 1 : vector<48x16xf32>, vector<48x16xf32> -> vector<48x32xf32>
    %cst_47 = arith.constant dense<0.000000e+00> : vector<48x32xf32>
    %153 = tpu.matmul %152, %78, %cst_47 {dimension_numbers = #tpu.dot_dimension_numbers<[1], [0], [0], [1], [0, 0, 1, 1], [], []>} : vector<48x32xf32>, vector<32x32xf32>, vector<48x32xf32> -> vector<48x32xf32>
    %154 = arith.addf %80, %153 : vector<48x32xf32>
    %155 = vector.broadcast %70 : vector<1x32xf32> to vector<48x32xf32>
    %156 = arith.addf %154, %155 : vector<48x32xf32>
    %157 = vector.extract_strided_slice %73 {offsets = [2, 0], sizes = [1, 32], strides = [1, 1]} : vector<6x32xf32> to vector<1x32xf32>
    %158 = vector.extract_strided_slice %73 {offsets = [3, 0], sizes = [1, 32], strides = [1, 1]} : vector<6x32xf32> to vector<1x32xf32>
    %cst_48 = arith.constant dense<0.000000e+00> : vector<48xf32>
    %159 = vector.multi_reduction <add>, %156, %cst_48 [1] : vector<48x32xf32> to vector<48xf32>
    %160 = vector.shape_cast %159 : vector<48xf32> to vector<48x1xf32>
    %cst_49 = arith.constant 3.200000e+01 : f32
    %161 = vector.broadcast %cst_49 : f32 to vector<48x1xf32>
    %162 = arith.divf %160, %161 : vector<48x1xf32>
    %163 = arith.mulf %156, %156 : vector<48x32xf32>
    %cst_50 = arith.constant dense<0.000000e+00> : vector<48xf32>
    %164 = vector.multi_reduction <add>, %163, %cst_50 [1] : vector<48x32xf32> to vector<48xf32>
    %165 = vector.shape_cast %164 : vector<48xf32> to vector<48x1xf32>
    %cst_51 = arith.constant 3.200000e+01 : f32
    %166 = vector.broadcast %cst_51 : f32 to vector<48x1xf32>
    %167 = arith.divf %165, %166 : vector<48x1xf32>
    %168 = arith.mulf %162, %162 : vector<48x1xf32>
    %169 = arith.subf %167, %168 : vector<48x1xf32>
    %170 = vector.broadcast %162 : vector<48x1xf32> to vector<48x32xf32>
    %171 = arith.subf %156, %170 : vector<48x32xf32>
    %cst_52 = arith.constant 9.99999997E-7 : f32
    %172 = vector.broadcast %cst_52 : f32 to vector<48x1xf32>
    %173 = arith.addf %169, %172 : vector<48x1xf32>
    %174 = math.rsqrt %173 : vector<48x1xf32>
    %175 = vector.broadcast %174 : vector<48x1xf32> to vector<48x32xf32>
    %176 = arith.mulf %171, %175 : vector<48x32xf32>
    %177 = vector.broadcast %157 : vector<1x32xf32> to vector<48x32xf32>
    %178 = arith.mulf %176, %177 : vector<48x32xf32>
    %179 = vector.broadcast %158 : vector<1x32xf32> to vector<48x32xf32>
    %180 = arith.addf %178, %179 : vector<48x32xf32>
    %cst_53 = arith.constant dense<0.000000e+00> : vector<48x128xf32>
    %181 = tpu.matmul %180, %77, %cst_53 {dimension_numbers = #tpu.dot_dimension_numbers<[1], [0], [0], [1], [0, 0, 1, 1], [], []>} : vector<48x32xf32>, vector<32x128xf32>, vector<48x128xf32> -> vector<48x128xf32>
    %182 = vector.broadcast %71 : vector<1x128xf32> to vector<48x128xf32>
    %183 = arith.addf %181, %182 : vector<48x128xf32>
    %cst_54 = arith.constant 5.000000e-01 : f32
    %184 = vector.broadcast %cst_54 : f32 to vector<48x128xf32>
    %185 = arith.mulf %184, %183 : vector<48x128xf32>
    %cst_55 = arith.constant 0.707106769 : f32
    %186 = vector.broadcast %cst_55 : f32 to vector<48x128xf32>
    %187 = arith.mulf %183, %186 : vector<48x128xf32>
    %cst_56 = arith.constant 0.000000e+00 : f32
    %188 = vector.broadcast %cst_56 : f32 to vector<48x128xf32>
    %189 = arith.cmpf oge, %187, %188 : vector<48x128xf32>
    %cst_57 = arith.constant 1.000000e+00 : f32
    %cst_58 = arith.constant -1.000000e+00 : f32
    %190 = vector.broadcast %cst_57 : f32 to vector<48x128xf32>
    %191 = vector.broadcast %cst_58 : f32 to vector<48x128xf32>
    %192 = arith.select %189, %190, %191 : vector<48x128xi1>, vector<48x128xf32>
    %193 = math.absf %187 : vector<48x128xf32>
    %cst_59 = arith.constant 0.327591091 : f32
    %194 = vector.broadcast %cst_59 : f32 to vector<48x128xf32>
    %195 = arith.mulf %194, %193 : vector<48x128xf32>
    %cst_60 = arith.constant 1.000000e+00 : f32
    %196 = vector.broadcast %cst_60 : f32 to vector<48x128xf32>
    %197 = arith.addf %196, %195 : vector<48x128xf32>
    %198 = tpu.reciprocal %197 {approx = true} : vector<48x128xf32> -> vector<48x128xf32>
    %cst_61 = arith.constant 1.06140542 : f32
    %199 = vector.broadcast %cst_61 : f32 to vector<48x128xf32>
    %200 = arith.mulf %199, %198 : vector<48x128xf32>
    %cst_62 = arith.constant -1.45315206 : f32
    %201 = vector.broadcast %cst_62 : f32 to vector<48x128xf32>
    %202 = arith.addf %200, %201 : vector<48x128xf32>
    %203 = arith.mulf %202, %198 : vector<48x128xf32>
    %cst_63 = arith.constant 1.42141378 : f32
    %204 = vector.broadcast %cst_63 : f32 to vector<48x128xf32>
    %205 = arith.addf %203, %204 : vector<48x128xf32>
    %206 = arith.mulf %205, %198 : vector<48x128xf32>
    %cst_64 = arith.constant -0.284496725 : f32
    %207 = vector.broadcast %cst_64 : f32 to vector<48x128xf32>
    %208 = arith.addf %206, %207 : vector<48x128xf32>
    %209 = arith.mulf %208, %198 : vector<48x128xf32>
    %cst_65 = arith.constant 0.254829586 : f32
    %210 = vector.broadcast %cst_65 : f32 to vector<48x128xf32>
    %211 = arith.addf %209, %210 : vector<48x128xf32>
    %212 = arith.mulf %211, %198 : vector<48x128xf32>
    %cst_66 = arith.constant 0.000000e+00 : f32
    %213 = vector.broadcast %cst_66 : f32 to vector<48x128xf32>
    %214 = arith.subf %213, %193 : vector<48x128xf32>
    %215 = arith.mulf %214, %193 : vector<48x128xf32>
    %216 = math.exp %215 : vector<48x128xf32>
    %217 = arith.mulf %212, %216 : vector<48x128xf32>
    %cst_67 = arith.constant 1.000000e+00 : f32
    %218 = vector.broadcast %cst_67 : f32 to vector<48x128xf32>
    %219 = arith.subf %218, %217 : vector<48x128xf32>
    %220 = arith.mulf %192, %219 : vector<48x128xf32>
    %cst_68 = arith.constant 1.000000e+00 : f32
    %221 = vector.broadcast %cst_68 : f32 to vector<48x128xf32>
    %222 = arith.addf %221, %220 : vector<48x128xf32>
    %223 = arith.mulf %185, %222 : vector<48x128xf32>
    %c0_69 = arith.constant 0 : index
    %c0_70 = arith.constant 0 : index
    %224 = vector.load %arg4[%c0_69, %c0_70] : memref<128x32xf32, #tpu.memory_space<vmem>>, vector<128x32xf32>
    %cst_71 = arith.constant dense<0.000000e+00> : vector<48x32xf32>
    %225 = tpu.matmul %223, %224, %cst_71 {dimension_numbers = #tpu.dot_dimension_numbers<[1], [0], [0], [1], [0, 0, 1, 1], [], []>} : vector<48x128xf32>, vector<128x32xf32>, vector<48x32xf32> -> vector<48x32xf32>
    %226 = arith.addf %156, %225 : vector<48x32xf32>
    %227 = vector.broadcast %72 : vector<1x32xf32> to vector<48x32xf32>
    %228 = arith.addf %226, %227 : vector<48x32xf32>
    %229 = vector.extract_strided_slice %73 {offsets = [4, 0], sizes = [1, 32], strides = [1, 1]} : vector<6x32xf32> to vector<1x32xf32>
    %230 = vector.extract_strided_slice %73 {offsets = [5, 0], sizes = [1, 32], strides = [1, 1]} : vector<6x32xf32> to vector<1x32xf32>
    %cst_72 = arith.constant dense<0.000000e+00> : vector<48xf32>
    %231 = vector.multi_reduction <add>, %228, %cst_72 [1] : vector<48x32xf32> to vector<48xf32>
    %232 = vector.shape_cast %231 : vector<48xf32> to vector<48x1xf32>
    %cst_73 = arith.constant 3.200000e+01 : f32
    %233 = vector.broadcast %cst_73 : f32 to vector<48x1xf32>
    %234 = arith.divf %232, %233 : vector<48x1xf32>
    %235 = arith.mulf %228, %228 : vector<48x32xf32>
    %cst_74 = arith.constant dense<0.000000e+00> : vector<48xf32>
    %236 = vector.multi_reduction <add>, %235, %cst_74 [1] : vector<48x32xf32> to vector<48xf32>
    %237 = vector.shape_cast %236 : vector<48xf32> to vector<48x1xf32>
    %cst_75 = arith.constant 3.200000e+01 : f32
    %238 = vector.broadcast %cst_75 : f32 to vector<48x1xf32>
    %239 = arith.divf %237, %238 : vector<48x1xf32>
    %240 = arith.mulf %234, %234 : vector<48x1xf32>
    %241 = arith.subf %239, %240 : vector<48x1xf32>
    %242 = vector.broadcast %234 : vector<48x1xf32> to vector<48x32xf32>
    %243 = arith.subf %228, %242 : vector<48x32xf32>
    %cst_76 = arith.constant 9.99999997E-7 : f32
    %244 = vector.broadcast %cst_76 : f32 to vector<48x1xf32>
    %245 = arith.addf %241, %244 : vector<48x1xf32>
    %246 = math.rsqrt %245 : vector<48x1xf32>
    %247 = vector.broadcast %246 : vector<48x1xf32> to vector<48x32xf32>
    %248 = arith.mulf %243, %247 : vector<48x32xf32>
    %249 = vector.broadcast %229 : vector<1x32xf32> to vector<48x32xf32>
    %250 = arith.mulf %248, %249 : vector<48x32xf32>
    %251 = vector.broadcast %230 : vector<1x32xf32> to vector<48x32xf32>
    %252 = arith.addf %250, %251 : vector<48x32xf32>
    %253 = vector.extract_strided_slice %252 {offsets = [0, 0], sizes = [24, 32], strides = [1, 1]} : vector<48x32xf32> to vector<24x32xf32>
    %254 = vector.extract_strided_slice %252 {offsets = [24, 0], sizes = [24, 32], strides = [1, 1]} : vector<48x32xf32> to vector<24x32xf32>
    %255 = arith.mulf %253, %253 : vector<24x32xf32>
    %cst_77 = arith.constant dense<0.000000e+00> : vector<24xf32>
    %256 = vector.multi_reduction <add>, %255, %cst_77 [1] : vector<24x32xf32> to vector<24xf32>
    %257 = vector.shape_cast %256 : vector<24xf32> to vector<24x1xf32>
    %cst_78 = arith.constant 9.99999996E-13 : f32
    %258 = vector.broadcast %cst_78 : f32 to vector<24x1xf32>
    %259 = arith.addf %257, %258 : vector<24x1xf32>
    %260 = math.rsqrt %259 : vector<24x1xf32>
    %261 = arith.mulf %254, %254 : vector<24x32xf32>
    %cst_79 = arith.constant dense<0.000000e+00> : vector<24xf32>
    %262 = vector.multi_reduction <add>, %261, %cst_79 [1] : vector<24x32xf32> to vector<24xf32>
    %263 = vector.shape_cast %262 : vector<24xf32> to vector<24x1xf32>
    %cst_80 = arith.constant 9.99999996E-13 : f32
    %264 = vector.broadcast %cst_80 : f32 to vector<24x1xf32>
    %265 = arith.addf %263, %264 : vector<24x1xf32>
    %266 = math.rsqrt %265 : vector<24x1xf32>
    %267 = vector.broadcast %260 : vector<24x1xf32> to vector<24x32xf32>
    %268 = arith.mulf %253, %267 : vector<24x32xf32>
    %269 = vector.broadcast %266 : vector<24x1xf32> to vector<24x32xf32>
    %270 = arith.mulf %254, %269 : vector<24x32xf32>
    %271 = arith.mulf %268, %270 : vector<24x32xf32>
    %cst_81 = arith.constant dense<0.000000e+00> : vector<24xf32>
    %272 = vector.multi_reduction <add>, %271, %cst_81 [1] : vector<24x32xf32> to vector<24xf32>
    %273 = vector.shape_cast %272 : vector<24xf32> to vector<24x1xf32>
    %274 = tpu.iota {dimensions = array<i32: 0>} : vector<24x1xi32>
    %c17_i32_82 = arith.constant 17 : i32
    %275 = vector.broadcast %c17_i32_82 : i32 to vector<24x1xi32>
    %276 = arith.cmpi slt, %274, %275 : vector<24x1xi32>
    %277 = arith.extui %276 : vector<24x1xi1> to vector<24x1xi32>
    %278 = arith.sitofp %277 : vector<24x1xi32> to vector<24x1xf32>
    %279 = arith.mulf %273, %278 : vector<24x1xf32>
    %280 = vector.shape_cast %279 : vector<24x1xf32> to vector<1x24x1xf32>
    %cst_83 = arith.constant dense<0.000000e+00> : vector<1xf32>
    %281 = vector.multi_reduction <add>, %280, %cst_83 [1, 2] : vector<1x24x1xf32> to vector<1xf32>
    %282 = vector.shape_cast %281 : vector<1xf32> to vector<1x1x1xf32>
    %283 = vector.extract %282[0, 0, 0] : f32 from vector<1x1x1xf32>
    %cst_84 = arith.constant 0.0588235296 : f32
    %284 = arith.mulf %283, %cst_84 : f32
    %cst_85 = arith.constant 1.000000e+00 : f32
    %285 = arith.addf %284, %cst_85 : f32
    %cst_86 = arith.constant 5.000000e-01 : f32
    %286 = arith.mulf %285, %cst_86 : f32
    %cst_87 = arith.constant 1.000000e+00 : f32
    %287 = vector.broadcast %cst_87 : f32 to vector<1x1xf32>
    %288 = vector.broadcast %286 : f32 to vector<1x1xf32>
    %289 = arith.mulf %288, %287 : vector<1x1xf32>
    %c0_88 = arith.constant 0 : index
    %c0_89 = arith.constant 0 : index
    %290 = vector.load %arg6[%c0_88, %c0_89] : memref<1x1xf32, #tpu.memory_space<vmem>>, vector<1x1xf32>
    tpu.vector_store %arg6[%c0_88, %c0_89], %289 {strides = array<i32>} : memref<1x1xf32, #tpu.memory_space<vmem>>, vector<1x1xf32>,
    return
  }
  func.func @transform_0(%arg0: i32) -> (i32, i32) {
    %c0_i32 = arith.constant 0 : i32
    %c0_i32_0 = arith.constant 0 : i32
    %c0_i32_1 = arith.constant 0 : i32
    return %c0_i32, %c0_i32_0 : i32, i32
  }
  func.func @transform_1(%arg0: i32) -> (i32, i32) {
    %c0_i32 = arith.constant 0 : i32
    %c0_i32_0 = arith.constant 0 : i32
    %c0_i32_1 = arith.constant 0 : i32
    return %c0_i32, %c0_i32_0 : i32, i32
  }
  func.func @transform_2(%arg0: i32) -> (i32, i32) {
    %c0_i32 = arith.constant 0 : i32
    %c0_i32_0 = arith.constant 0 : i32
    %c0_i32_1 = arith.constant 0 : i32
    return %c0_i32, %c0_i32_0 : i32, i32
  }
  func.func @transform_3(%arg0: i32) -> (i32, i32) {
    %c0_i32 = arith.constant 0 : i32
    %c0_i32_0 = arith.constant 0 : i32
    %c0_i32_1 = arith.constant 0 : i32
    return %c0_i32, %c0_i32_0 : i32, i32
  }
  func.func @transform_4(%arg0: i32) -> (i32, i32) {
    %c0_i32 = arith.constant 0 : i32
    %c0_i32_0 = arith.constant 0 : i32
    %c0_i32_1 = arith.constant 0 : i32
    return %c0_i32, %c0_i32_0 : i32, i32
  }
  func.func @transform_5(%arg0: i32) -> (i32, i32) {
    %c0_i32 = arith.constant 0 : i32
    %c0_i32_0 = arith.constant 0 : i32
    %c0_i32_1 = arith.constant 0 : i32
    return %c0_i32, %c0_i32_0 : i32, i32
  }
}

</mosaic_0001>

<llo_original>
// kernel: dino_similarity.1
$region0: #{dino_similarity.1}
  #allocation0 [shape = 'u32[]', space=smem, size = 0x4, offset = 0x4, fixed_abs, tag = 'smem constant byte address 0x4 - core index']
  #allocation1 [shape = 'u32[144,128]{1,0:T(1,128)}', space=vmem, size = 0x12000, scoped, tag = 'internal scratch']
  %s0 = inlined_call_operand.vmem [shape: f32[48,48], index: 0, kind: input, shape index: {}]
  %s1 = inlined_call_operand.vmem [shape: f32[96,32], index: 1, kind: input, shape index: {}]
  %s2 = inlined_call_operand.vmem [shape: f32[32,384], index: 2, kind: input, shape index: {}]
  %s3 = inlined_call_operand.vmem [shape: f32[128,32], index: 3, kind: input, shape index: {}]
  %s4 = inlined_call_operand.vmem [shape: f32[88,128], index: 4, kind: input, shape index: {}]
  %s5 = inlined_call_operand.hbm [shape: f32[1,1], index: 5, kind: output, shape index: {}]
  %s6 = sld [smem:[#allocation0]]
  $region30: #{dino_similarity.1} parent=0
    _
  %s8 = ssub.s32 1, %s6
  %s9 = scalar_select 0, %s8, %s6
  $region1: #{dino_similarity.1} parent=0
    #allocation2 [shape = 'u8[512]{0}', space=vmem, size = 0x400, scoped, tag = 'output window, operand 0, single buffered']
    #allocation3 [shape = 's32[1]{0}', space=sflag, size = 0x4, scoped, tag = 'scoped memory for dino_similarity.1']
    %10 = vsyncpa [#allocation3], 0
    // Predicated region
    $region2: #{dino_similarity.1} parent=1 // pred_check
      _
    $region3: #{dino_similarity.1} parent=1 // pred_check_branch
      %12 = sbr.rel (0) target = $region5
    $region4: #{dino_similarity.1} parent=1 // pred_region
      _
    $region5: #{dino_similarity.1} parent=1 // pred_fallthru
      _
    // Predicated region
    $region6: #{dino_similarity.1} parent=1 // pred_check
      _
    $region7: #{dino_similarity.1} parent=1 // pred_check_branch
      %14 = sbr.rel (0) target = $region9
    $region8: #{dino_similarity.1} parent=1 // pred_region
      _
    $region9: #{dino_similarity.1} parent=1 // pred_fallthru
      _
    // Predicated region
    $region10: #{dino_similarity.1} parent=1 // pred_check
      _
    $region11: #{dino_similarity.1} parent=1 // pred_check_branch
      %16 = sbr.rel (0) target = $region13
    $region12: #{dino_similarity.1} parent=1 // pred_region
      _
    $region13: #{dino_similarity.1} parent=1 // pred_fallthru
      _
    // Predicated region
    $region14: #{dino_similarity.1} parent=1 // pred_check
      _
    $region15: #{dino_similarity.1} parent=1 // pred_check_branch
      %18 = sbr.rel (0) target = $region17
    $region16: #{dino_similarity.1} parent=1 // pred_region
      _
    $region17: #{dino_similarity.1} parent=1 // pred_fallthru
      _
    // Predicated region
    $region18: #{dino_similarity.1} parent=1 // pred_check
      _
    $region19: #{dino_similarity.1} parent=1 // pred_check_branch
      %20 = sbr.rel (0) target = $region21
    $region20: #{dino_similarity.1} parent=1 // pred_region
      _
    $region21: #{dino_similarity.1} parent=1 // pred_fallthru
      _
    %v21 = vlaneseq
    %v22 = vshrl.u32 %v21, 7
    %v23 = vadd.s32 %v22, 8
    %v24 = vadd.s32 %v22, 16
    %v25 = vadd.s32 %v22, 24
    %v26 = vadd.s32 %v22, 32
    %v27 = vadd.s32 %v22, 40
    %vm28 = vcmp.lt.s32.totalorder %v22, 24
    %vm29 = vcmp.lt.s32.totalorder %v23, 24
    %vm30 = vcmp.lt.s32.totalorder %v24, 24
    %vm31 = vcmp.lt.s32.totalorder %v25, 24
    %vm32 = vcmp.lt.s32.totalorder %v26, 24
    %vm33 = vcmp.lt.s32.totalorder %v27, 24
    %v34 = vsub.s32 %v22, 24
    %v35 = vsub.s32 %v23, 24
    %v36 = vsub.s32 %v24, 24
    %v37 = vsub.s32 %v26, 24
    %v38 = vsub.s32 %v27, 24
    %v39 = vsel %vm28, %v22, %v34
    %v40 = vsel %vm29, %v23, %v35
    %v41 = vsel %vm30, %v24, %v36
    %v42 = vsel %vm31, %v25, %v22
    %v43 = vsel %vm32, %v26, %v37
    %v44 = vsel %vm33, %v27, %v38
    %vm45 = vcmp.ge.s32.totalorder %v39, 1
    %vm46 = vcmp.ge.s32.totalorder %v40, 1
    %vm47 = vcmp.ge.s32.totalorder %v41, 1
    %vm48 = vcmp.ge.s32.totalorder %v42, 1
    %vm49 = vcmp.ge.s32.totalorder %v43, 1
    %vm50 = vcmp.ge.s32.totalorder %v44, 1
    %vm51 = vcmp.lt.s32.totalorder %v39, 17
    %vm52 = vcmp.lt.s32.totalorder %v40, 17
    %vm53 = vcmp.lt.s32.totalorder %v41, 17
    %vm54 = vcmp.lt.s32.totalorder %v42, 17
    %vm55 = vcmp.lt.s32.totalorder %v43, 17
    %vm56 = vcmp.lt.s32.totalorder %v44, 17
    %vm57 = vmand %vm45, %vm51
    %vm58 = vmand %vm46, %vm52
    %vm59 = vmand %vm47, %vm53
    %vm60 = vmand %vm48, %vm54
    %vm61 = vmand %vm49, %vm55
    %vm62 = vmand %vm50, %vm56
    %vm63 = vcmp.ge.s32.totalorder %v22, 24
    %vm64 = vcmp.ge.s32.totalorder %v23, 24
    %vm65 = vcmp.ge.s32.totalorder %v24, 24
    %vm66 = vcmp.ge.s32.totalorder %v25, 24
    %vm67 = vcmp.ge.s32.totalorder %v26, 24
    %vm68 = vcmp.ge.s32.totalorder %v27, 24
    %v69 = vld [vmem:[%s0] sm:$0xff]
    %v70 = vld [vmem:[%s0 + $0x8] sm:$0xff]
    %v71 = vld [vmem:[%s0 + $0x10] sm:$0xff]
    %v72 = vld [vmem:[%s0 + $0x18] sm:$0xff]
    %v73 = vld [vmem:[%s0 + $0x20] sm:$0xff]
    %v74 = vld [vmem:[%s0 + $0x28] sm:$0xff]
    %v75 = vsel %vm57, 1, 0
    %v76 = vsel %vm58, 1, 0
    %v77 = vsel %vm59, 1, 0
    %v78 = vsel %vm60, 1, 0
    %v79 = vsel %vm61, 1, 0
    %v80 = vsel %vm62, 1, 0
    %vm81 = vcmp.eq.s32.totalorder %v75, 1
    %vm82 = vcmp.eq.s32.totalorder %v76, 1
    %vm83 = vcmp.eq.s32.totalorder %v77, 1
    %vm84 = vcmp.eq.s32.totalorder %v78, 1
    %vm85 = vcmp.eq.s32.totalorder %v79, 1
    %vm86 = vcmp.eq.s32.totalorder %v80, 1
    %v87 = vsel %vm81, %v69, 3e+38
    %v88 = vsel %vm82, %v70, 3e+38
    %v89 = vsel %vm83, %v71, 3e+38
    %v90 = vsel %vm84, %v72, 3e+38
    %v91 = vsel %vm85, %v73, 3e+38
    %v92 = vsel %vm86, %v74, 3e+38
    %vm93 = vcmask 392192
    %v94 = vsel %vm93, %v87, inf
    %95 = vmin.xlane.f32.xlu0 %v94
    %v96 = vpop.xlane.xlu0 %95
    %v97 = vsel %vm93, %v88, inf
    %98 = vmin.xlane.f32.xlu0 %v97
    %v99 = vpop.xlane.xlu0 %98
    %v100 = vsel %vm93, %v89, inf
    %101 = vmin.xlane.f32.xlu0 %v100
    %v102 = vpop.xlane.xlu0 %101
    %v103 = vsel %vm93, %v90, inf
    %104 = vmin.xlane.f32.xlu0 %v103
    %v105 = vpop.xlane.xlu0 %104
    %v106 = vsel %vm93, %v91, inf
    %107 = vmin.xlane.f32.xlu0 %v106
    %v108 = vpop.xlane.xlu0 %107
    %v109 = vsel %vm93, %v92, inf
    %110 = vmin.xlane.f32.xlu0 %v109
    %v111 = vpop.xlane.xlu0 %110
    %v112 = vsel %vm81, %v69, -3e+38
    %v113 = vsel %vm82, %v70, -3e+38
    %v114 = vsel %vm83, %v71, -3e+38
    %v115 = vsel %vm84, %v72, -3e+38
    %v116 = vsel %vm85, %v73, -3e+38
    %v117 = vsel %vm86, %v74, -3e+38
    %v118 = vsel %vm93, %v112, -inf
    %119 = vmax.xlane.f32.xlu0 %v118
    %v120 = vpop.xlane.xlu0 %119
    %v121 = vsel %vm93, %v113, -inf
    %122 = vmax.xlane.f32.xlu0 %v121
    %v123 = vpop.xlane.xlu0 %122
    %v124 = vsel %vm93, %v114, -inf
    %125 = vmax.xlane.f32.xlu0 %v124
    %v126 = vpop.xlane.xlu0 %125
    %v127 = vsel %vm93, %v115, -inf
    %128 = vmax.xlane.f32.xlu0 %v127
    %v129 = vpop.xlane.xlu0 %128
    %v130 = vsel %vm93, %v116, -inf
    %131 = vmax.xlane.f32.xlu0 %v130
    %v132 = vpop.xlane.xlu0 %131
    %v133 = vsel %vm93, %v117, -inf
    %134 = vmax.xlane.f32.xlu0 %v133
    %v135 = vpop.xlane.xlu0 %134
    %v136 = vmin.f32 %v96, %v99
    %v137 = vmin.f32 %v136, %v102
    %v138 = vrot.slane %v137, 4
    %v139 = vmin.f32 %v137, %v138
    %v140 = vrot.slane %v139, 2
    %v141 = vmin.f32 %v139, %v140
    %v142 = vrot.slane %v141, 1
    %v143 = vmin.f32 %v141, %v142
    %s144 = vtos %v143
    %v145 = vmin.f32 %v105, %v108
    %v146 = vmin.f32 %v145, %v111
    %v147 = vrot.slane %v146, 4
    %v148 = vmin.f32 %v146, %v147
    %v149 = vrot.slane %v148, 2
    %v150 = vmin.f32 %v148, %v149
    %v151 = vrot.slane %v150, 1
    %v152 = vmin.f32 %v150, %v151
    %s153 = vtos %v152
    %v154 = vmax.f32 %v120, %v123
    %v155 = vmax.f32 %v154, %v126
    %v156 = vrot.slane %v155, 4
    %v157 = vmax.f32 %v155, %v156
    %v158 = vrot.slane %v157, 2
    %v159 = vmax.f32 %v157, %v158
    %v160 = vrot.slane %v159, 1
    %v161 = vmax.f32 %v159, %v160
    %s162 = vtos %v161
    %v163 = vmax.f32 %v129, %v132
    %v164 = vmax.f32 %v163, %v135
    %v165 = vrot.slane %v164, 4
    %v166 = vmax.f32 %v164, %v165
    %v167 = vrot.slane %v166, 2
    %v168 = vmax.f32 %v166, %v167
    %v169 = vrot.slane %v168, 1
    %v170 = vmax.f32 %v168, %v169
    %s171 = vtos %v170
    %v172 = vstv %s153
    %v173 = vstv %s144
    %v174 = vsel %vm63, %v172, %v173
    %v175 = vsel %vm64, %v172, %v173
    %v176 = vsel %vm65, %v172, %v173
    %v177 = vsel %vm66, %v172, %v173
    %v178 = vsel %vm67, %v172, %v173
    %v179 = vsel %vm68, %v172, %v173
    %v180 = vstv %s171
    %v181 = vstv %s162
    %v182 = vsel %vm63, %v180, %v181
    %v183 = vsel %vm64, %v180, %v181
    %v184 = vsel %vm65, %v180, %v181
    %v185 = vsel %vm66, %v180, %v181
    %v186 = vsel %vm67, %v180, %v181
    %v187 = vsel %vm68, %v180, %v181
    %v188 = vsub.f32 %v182, %v174
    %v189 = vsub.f32 %v183, %v175
    %v190 = vsub.f32 %v184, %v176
    %v191 = vsub.f32 %v185, %v177
    %v192 = vsub.f32 %v186, %v178
    %v193 = vsub.f32 %v187, %v179
    %v194 = vmax.f32 %v188, 1e-12
    %v195 = vmax.f32 %v189, 1e-12
    %v196 = vmax.f32 %v190, 1e-12
    %v197 = vmax.f32 %v191, 1e-12
    %v198 = vmax.f32 %v192, 1e-12
    %v199 = vmax.f32 %v193, 1e-12
    %v200 = vrcp.pop %v194
    %v201 = vrcp.pop %v195
    %v202 = vrcp.pop %v196
    %v203 = vrcp.pop %v197
    %v204 = vrcp.pop %v198
    %v205 = vrcp.pop %v199
    %v206 = vmul.f32 %v194, %v200
    %v207 = vmul.f32 %v195, %v201
    %v208 = vmul.f32 %v196, %v202
    %v209 = vmul.f32 %v197, %v203
    %v210 = vmul.f32 %v198, %v204
    %v211 = vmul.f32 %v199, %v205
    %v212 = vsub.f32 2.0, %v206
    %v213 = vsub.f32 2.0, %v207
    %v214 = vsub.f32 2.0, %v208
    %v215 = vsub.f32 2.0, %v209
    %v216 = vsub.f32 2.0, %v210
    %v217 = vsub.f32 2.0, %v211
    %v218 = vmul.f32 %v200, %v212
    %v219 = vmul.f32 %v201, %v213
    %v220 = vmul.f32 %v202, %v214
    %v221 = vmul.f32 %v203, %v215
    %v222 = vmul.f32 %v204, %v216
    %v223 = vmul.f32 %v205, %v217
    %v224 = vsub.f32 %v69, %v174
    %v225 = vsub.f32 %v70, %v175
    %v226 = vsub.f32 %v71, %v176
    %v227 = vsub.f32 %v72, %v177
    %v228 = vsub.f32 %v73, %v178
    %v229 = vsub.f32 %v74, %v179
    %v230 = vmul.f32 %v224, %v218
    %v231 = vmul.f32 %v225, %v219
    %v232 = vmul.f32 %v226, %v220
    %v233 = vmul.f32 %v227, %v221
    %v234 = vmul.f32 %v228, %v222
    %v235 = vmul.f32 %v229, %v223
    %v236 = vsel %vm81, %v230, 0.0
    %v237 = vsel %vm82, %v231, 0.0
    %v238 = vsel %vm83, %v232, 0.0
    %v239 = vsel %vm84, %v233, 0.0
    %v240 = vsel %vm85, %v234, 0.0
    %v241 = vsel %vm86, %v235, 0.0
    %v242 = vld [vmem:[%s4] sm:$0xff]
    %v243 = vld [vmem:[%s4 + $0x8] sm:$0xff]
    %v244 = vld [vmem:[%s4 + $0x10] sm:$0xff]
    %v245 = vld [vmem:[%s4 + $0x18] sm:$0xff]
    %v246 = vld [vmem:[%s4 + $0x20] sm:$0xff]
    %v247 = vld [vmem:[%s4 + $0x28] sm:$0xff]
    %v248 = vld [vmem:[%s4 + $0x30] sm:$0x1]
    %v249 = vld [vmem:[%s4 + $0x38] sm:$0x1]
    %v250 = vld [vmem:[%s4 + $0x40] sm:$0x1]
    %v251 = vld [vmem:[%s4 + $0x48] sm:$0x1]
    %v252 = vld [vmem:[%s4 + $0x50] sm:$0x3f]
    %v253 = vld [vmem:[%s1] sm:$0xff]
    %v254 = vld [vmem:[%s1 + $0x8] sm:$0xff]
    %v255 = vld [vmem:[%s1 + $0x10] sm:$0xff]
    %v256 = vld [vmem:[%s1 + $0x18] sm:$0xff]
    %v257 = vld [vmem:[%s1 + $0x20] sm:$0xff]
    %v258 = vld [vmem:[%s1 + $0x28] sm:$0xff]
    %v259 = vld [vmem:[%s1 + $0x30] sm:$0xff]
    %v260 = vld [vmem:[%s1 + $0x38] sm:$0xff]
    %v261 = vld [vmem:[%s1 + $0x40] sm:$0xff]
    %v262 = vld [vmem:[%s1 + $0x48] sm:$0xff]
    %v263 = vld [vmem:[%s1 + $0x50] sm:$0xff]
    %v264 = vld [vmem:[%s1 + $0x58] sm:$0xff]
    %v265 = vld [vmem:[%s2] sm:$0xff]
    %v266 = vld [vmem:[%s2 + $0x18] sm:$0xff]
    %v267 = vld [vmem:[%s2 + $0x30] sm:$0xff]
    %v268 = vld [vmem:[%s2 + $0x48] sm:$0xff]
    %v269 = vld [vmem:[%s2 + $0x8] sm:$0xff]
    %v270 = vld [vmem:[%s2 + $0x20] sm:$0xff]
    %v271 = vld [vmem:[%s2 + $0x38] sm:$0xff]
    %v272 = vld [vmem:[%s2 + $0x50] sm:$0xff]
    %v273 = vld [vmem:[%s2 + $0x10] sm:$0xff]
    %v274 = vld [vmem:[%s2 + $0x28] sm:$0xff]
    %v275 = vld [vmem:[%s2 + $0x40] sm:$0xff]
    %v276 = vld [vmem:[%s2 + $0x58] sm:$0xff]
    %v278 = vsel %vm93, %v236, 0
    %v281 = vsel %vm93, %v237, 0
    %v284 = vsel %vm93, %v238, 0
    %v287 = vsel %vm93, %v239, 0
    %v290 = vsel %vm93, %v240, 0
    %v293 = vsel %vm93, %v241, 0
    %295 = vmatprep.subr.mxu0 0.0
    %296 = vmatpush1.msra.mxu0 %v253
    %297 = vmatprep.subr.mxu0 0.0
    %298 = vmatpush1.msra.mxu0 %v254
    %299 = vmatprep.subr.mxu0 0.0
    %300 = vmatpush1.msra.mxu0 %v255
    %301 = vmatprep.subr.mxu0 0.0
    %302 = vmatpush1.msra.mxu0 %v256
    %303 = vmatprep.subr.mxu0 0.0
    %304 = vmatpush1.msra.mxu0 %v257
    %305 = vmatprep.subr.mxu0 0.0
    %306 = vmatpush1.msra.mxu0 %v258
    %307 = vmatprep.subr.mxu0 0.0
    %308 = vmatpush1.msra.mxu0 0.0
    %309 = vmatprep.subr.mxu0 0.0
    %310 = vmatpush1.msra.mxu0 0.0
    %311 = vmatprep.subr.mxu0 0.0
    %312 = vmatpush1.msra.mxu0 0.0
    %313 = vmatprep.subr.mxu0 0.0
    %314 = vmatpush1.msra.mxu0 0.0
    %315 = vmatprep.subr.mxu0 0.0
    %316 = vmatpush1.msra.mxu0 0.0
    %317 = vmatprep.subr.mxu0 0.0
    %318 = vmatpush1.msra.mxu0 0.0
    %319 = vmatprep.subr.mxu0 0.0
    %320 = vmatpush1.msra.mxu0 0.0
    %321 = vmatprep.subr.mxu0 0.0
    %322 = vmatpush1.msra.mxu0 0.0
    %323 = vmatprep.subr.mxu0 0.0
    %324 = vmatpush1.msra.mxu0 0.0
    %325 = vmatprep.subr.mxu0 0.0
    %326 = vmatpush1.msra.mxu0 0.0
    %327 = vmatprep.subr.mxu0 0.0
    %328 = vmatpush1.msra.mxu0 0.0
    %329 = vmatprep.subr.mxu0 0.0
    %330 = vmatpush1.msra.mxu0 0.0
    %331 = vmatprep.subr.mxu0 0.0
    %332 = vmatpush1.msra.mxu0 0.0
    %333 = vmatprep.subr.mxu0 0.0
    %334 = vmatpush1.msra.mxu0 0.0
    %335 = vmatprep.subr.mxu0 0.0
    %336 = vmatpush1.msra.mxu0 0.0
    %337 = vmatprep.subr.mxu0 0.0
    %338 = vmatpush1.msra.mxu0 0.0
    %339 = vmatprep.subr.mxu0 0.0
    %340 = vmatpush1.msra.mxu0 0.0
    %341 = vmatprep.subr.mxu0 0.0
    %342 = vmatpush1.msra.mxu0 0.0
    %343 = vmatprep.subr.mxu0 0.0
    %344 = vmatpush1.msra.mxu0 0.0
    %345 = vmatprep.subr.mxu0 0.0
    %346 = vmatpush1.msra.mxu0 0.0
    %347 = vmatprep.subr.mxu0 0.0
    %348 = vmatpush1.msra.mxu0 0.0
    %349 = vmatprep.subr.mxu0 0.0
    %350 = vmatpush1.msra.mxu0 0.0
    %351 = vmatprep.subr.mxu0 0.0
    %352 = vmatpush1.msra.mxu0 0.0
    %353 = vmatprep.subr.mxu0 0.0
    %354 = vmatpush1.msra.mxu0 0.0
    %355 = vmatprep.subr.mxu0 0.0
    %356 = vmatpush1.msra.mxu0 0.0
    %357 = vmatprep.subr.mxu0 0.0
    %358 = vmatpush1.msra.mxu0 0.0
    %359 = vmatprep.mubr.f32.mxu0 0.0
    %360 = vmatmul.mubr.f32.gmra.mrb[0].mxu0 %v278
    %v361 = vpop.f32.mrb[0].mxu0
    %v362 = vadd.f32 %v259, %v361
    %v363 = vpop.f32.mrb[0].mxu0
    %364 = vmatprep.mubr.f32.mxu0 0.0
    %365 = vmatmul.mubr.f32.gmra.mrb[0].mxu0 %v281
    %v366 = vpop.f32.mrb[0].mxu0
    %v367 = vadd.f32 %v260, %v366
    %v368 = vpop.f32.mrb[0].mxu0
    %369 = vmatprep.mubr.f32.mxu0 0.0
    %370 = vmatmul.mubr.f32.gmra.mrb[0].mxu0 %v284
    %v371 = vpop.f32.mrb[0].mxu0
    %v372 = vadd.f32 %v261, %v371
    %v373 = vpop.f32.mrb[0].mxu0
    %374 = vmatprep.mubr.f32.mxu0 0.0
    %375 = vmatmul.mubr.f32.gmra.mrb[0].mxu0 %v287
    %v376 = vpop.f32.mrb[0].mxu0
    %v377 = vadd.f32 %v262, %v376
    %v378 = vpop.f32.mrb[0].mxu0
    %379 = vmatprep.mubr.f32.mxu0 0.0
    %380 = vmatmul.mubr.f32.gmra.mrb[0].mxu0 %v290
    %v381 = vpop.f32.mrb[0].mxu0
    %v382 = vadd.f32 %v263, %v381
    %v383 = vpop.f32.mrb[0].mxu0
    %384 = vmatprep.mubr.f32.mxu0 0.0
    %385 = vmatmul.mubr.f32.gmra.mrb[0].mxu0 %v293
    %v386 = vpop.f32.mrb[0].mxu0
    %v387 = vadd.f32 %v264, %v386
    %v388 = vpop.f32.mrb[0].mxu0
    %389 = vdwg.mxu0
    %vm390 = vcmask 261120
    %v391 = vsel %vm390, %v362, 0.0
    %392 = vadd.xlane.f32.xlu0 %v391
    %v393 = vpop.xlane.xlu0 %392
    %v394 = vsel %vm390, %v367, 0.0
    %395 = vadd.xlane.f32.xlu0 %v394
    %v396 = vpop.xlane.xlu0 %395
    %v397 = vsel %vm390, %v372, 0.0
    %398 = vadd.xlane.f32.xlu0 %v397
    %v399 = vpop.xlane.xlu0 %398
    %v400 = vsel %vm390, %v377, 0.0
    %401 = vadd.xlane.f32.xlu0 %v400
    %v402 = vpop.xlane.xlu0 %401
    %v403 = vsel %vm390, %v382, 0.0
    %404 = vadd.xlane.f32.xlu0 %v403
    %v405 = vpop.xlane.xlu0 %404
    %v406 = vsel %vm390, %v387, 0.0
    %407 = vadd.xlane.f32.xlu0 %v406
    %v408 = vpop.xlane.xlu0 %407
    %v409 = vrcp.pop 32.0
    %v410 = vmul.f32 %v393, %v409
    %v411 = vmul.f32 %v396, %v409
    %v412 = vmul.f32 %v399, %v409
    %v413 = vmul.f32 %v402, %v409
    %v414 = vmul.f32 %v405, %v409
    %v415 = vmul.f32 %v408, %v409
    %v416 = vmul.f32 %v362, %v362
    %v417 = vmul.f32 %v367, %v367
    %v418 = vmul.f32 %v372, %v372
    %v419 = vmul.f32 %v377, %v377
    %v420 = vmul.f32 %v382, %v382
    %v421 = vmul.f32 %v387, %v387
    %v422 = vsel %vm390, %v416, 0.0
    %423 = vadd.xlane.f32.xlu0 %v422
    %v424 = vpop.xlane.xlu0 %423
    %v425 = vsel %vm390, %v417, 0.0
    %426 = vadd.xlane.f32.xlu0 %v425
    %v427 = vpop.xlane.xlu0 %426
    %v428 = vsel %vm390, %v418, 0.0
    %429 = vadd.xlane.f32.xlu0 %v428
    %v430 = vpop.xlane.xlu0 %429
    %v431 = vsel %vm390, %v419, 0.0
    %432 = vadd.xlane.f32.xlu0 %v431
    %v433 = vpop.xlane.xlu0 %432
    %v434 = vsel %vm390, %v420, 0.0
    %435 = vadd.xlane.f32.xlu0 %v434
    %v436 = vpop.xlane.xlu0 %435
    %v437 = vsel %vm390, %v421, 0.0
    %438 = vadd.xlane.f32.xlu0 %v437
    %v439 = vpop.xlane.xlu0 %438
    %v440 = vmul.f32 %v424, %v409
    %v441 = vmul.f32 %v427, %v409
    %v442 = vmul.f32 %v430, %v409
    %v443 = vmul.f32 %v433, %v409
    %v444 = vmul.f32 %v436, %v409
    %v445 = vmul.f32 %v439, %v409
    %v446 = vmul.f32 %v410, %v410
    %v447 = vmul.f32 %v411, %v411
    %v448 = vmul.f32 %v412, %v412
    %v449 = vmul.f32 %v413, %v413
    %v450 = vmul.f32 %v414, %v414
    %v451 = vmul.f32 %v415, %v415
    %v452 = vsub.f32 %v440, %v446
    %v453 = vsub.f32 %v441, %v447
    %v454 = vsub.f32 %v442, %v448
    %v455 = vsub.f32 %v443, %v449
    %v456 = vsub.f32 %v444, %v450
    %v457 = vsub.f32 %v445, %v451
    %v458 = vsub.f32 %v362, %v410
    %v459 = vsub.f32 %v367, %v411
    %v460 = vsub.f32 %v372, %v412
    %v461 = vsub.f32 %v377, %v413
    %v462 = vsub.f32 %v382, %v414
    %v463 = vsub.f32 %v387, %v415
    %v464 = vadd.f32 %v452, 1e-06
    %v465 = vadd.f32 %v453, 1e-06
    %v466 = vadd.f32 %v454, 1e-06
    %v467 = vadd.f32 %v455, 1e-06
    %v468 = vadd.f32 %v456, 1e-06
    %v469 = vadd.f32 %v457, 1e-06
    %v470 = vrsqrt.pop %v464
    %v471 = vrsqrt.pop %v465
    %v472 = vrsqrt.pop %v466
    %v473 = vrsqrt.pop %v467
    %v474 = vrsqrt.pop %v468
    %v475 = vrsqrt.pop %v469
    %v476 = vmul.f32 %v458, %v470
    %v477 = vmul.f32 %v459, %v471
    %v478 = vmul.f32 %v460, %v472
    %v479 = vmul.f32 %v461, %v473
    %v480 = vmul.f32 %v462, %v474
    %v481 = vmul.f32 %v463, %v475
    %v482 = vlaneseq
    %v483 = vshrl.u32 %v482, 7
    %v484 = vsub.s32 0, %v483
    %v485 = vrot.slane %v252, %v484
    %v486 = vmul.f32 %v476, %v485
    %v487 = vmul.f32 %v477, %v485
    %v488 = vmul.f32 %v478, %v485
    %v489 = vmul.f32 %v479, %v485
    %v490 = vmul.f32 %v480, %v485
    %v491 = vmul.f32 %v481, %v485
    %v492 = vlaneseq
    %v493 = vshrl.u32 %v492, 7
    %v494 = vsub.s32 1, %v493
    %v495 = vrot.slane %v252, %v494
    %v496 = vadd.f32 %v486, %v495
    %v497 = vadd.f32 %v487, %v495
    %v498 = vadd.f32 %v488, %v495
    %v499 = vadd.f32 %v489, %v495
    %v500 = vadd.f32 %v490, %v495
    %v501 = vadd.f32 %v491, %v495
    %v502 = vlaneseq
    %v503 = vshrl.u32 %v502, 7
    %v504 = vsub.s32 0, %v503
    %v505 = vrot.slane %v248, %v504
    %v507 = vsel %vm390, %v496, 0
    %v510 = vsel %vm390, %v497, 0
    %v513 = vsel %vm390, %v498, 0
    %v516 = vsel %vm390, %v499, 0
    %v519 = vsel %vm390, %v500, 0
    %v522 = vsel %vm390, %v501, 0
    %524 = vmatprep.subr.mxu0 0.0
    %525 = vmatpush1.msra.mxu0 %v265
    %526 = vmatprep.subr.mxu0 0.0
    %527 = vmatpush1.msra.mxu0 %v266
    %528 = vmatprep.subr.mxu0 0.0
    %529 = vmatpush1.msra.mxu0 %v267
    %530 = vmatprep.subr.mxu0 0.0
    %531 = vmatpush1.msra.mxu0 %v268
    %532 = vmatprep.subr.mxu0 0.0
    %533 = vmatpush1.msra.mxu0 0.0
    %534 = vmatprep.subr.mxu0 0.0
    %535 = vmatpush1.msra.mxu0 0.0
    %536 = vmatprep.subr.mxu0 0.0
    %537 = vmatpush1.msra.mxu0 0.0
    %538 = vmatprep.subr.mxu0 0.0
    %539 = vmatpush1.msra.mxu0 0.0
    %540 = vmatprep.subr.mxu0 0.0
    %541 = vmatpush1.msra.mxu0 0.0
    %542 = vmatprep.subr.mxu0 0.0
    %543 = vmatpush1.msra.mxu0 0.0
    %544 = vmatprep.subr.mxu0 0.0
    %545 = vmatpush1.msra.mxu0 0.0
    %546 = vmatprep.subr.mxu0 0.0
    %547 = vmatpush1.msra.mxu0 0.0
    %548 = vmatprep.subr.mxu0 0.0
    %549 = vmatpush1.msra.mxu0 0.0
    %550 = vmatprep.subr.mxu0 0.0
    %551 = vmatpush1.msra.mxu0 0.0
    %552 = vmatprep.subr.mxu0 0.0
    %553 = vmatpush1.msra.mxu0 0.0
    %554 = vmatprep.subr.mxu0 0.0
    %555 = vmatpush1.msra.mxu0 0.0
    %556 = vmatprep.subr.mxu0 0.0
    %557 = vmatpush1.msra.mxu0 0.0
    %558 = vmatprep.subr.mxu0 0.0
    %559 = vmatpush1.msra.mxu0 0.0
    %560 = vmatprep.subr.mxu0 0.0
    %561 = vmatpush1.msra.mxu0 0.0
    %562 = vmatprep.subr.mxu0 0.0
    %563 = vmatpush1.msra.mxu0 0.0
    %564 = vmatprep.subr.mxu0 0.0
    %565 = vmatpush1.msra.mxu0 0.0
    %566 = vmatprep.subr.mxu0 0.0
    %567 = vmatpush1.msra.mxu0 0.0
    %568 = vmatprep.subr.mxu0 0.0
    %569 = vmatpush1.msra.mxu0 0.0
    %570 = vmatprep.subr.mxu0 0.0
    %571 = vmatpush1.msra.mxu0 0.0
    %572 = vmatprep.subr.mxu0 0.0
    %573 = vmatpush1.msra.mxu0 0.0
    %574 = vmatprep.subr.mxu0 0.0
    %575 = vmatpush1.msra.mxu0 0.0
    %576 = vmatprep.subr.mxu0 0.0
    %577 = vmatpush1.msra.mxu0 0.0
    %578 = vmatprep.subr.mxu0 0.0
    %579 = vmatpush1.msra.mxu0 0.0
    %580 = vmatprep.subr.mxu0 0.0
    %581 = vmatpush1.msra.mxu0 0.0
    %582 = vmatprep.subr.mxu0 0.0
    %583 = vmatpush1.msra.mxu0 0.0
    %584 = vmatprep.subr.mxu0 0.0
    %585 = vmatpush1.msra.mxu0 0.0
    %586 = vmatprep.subr.mxu0 0.0
    %587 = vmatpush1.msra.mxu0 0.0
    %588 = vmatprep.mubr.f32.mxu0 0.0
    %589 = vmatmul.mubr.f32.gmra.mrb[0].mxu0 %v507
    %v590 = vpop.f32.mrb[0].mxu0
    %v591 = vadd.f32 %v505, %v590
    %v592 = vpop.f32.mrb[0].mxu0
    %593 = vmatprep.mubr.f32.mxu0 0.0
    %594 = vmatmul.mubr.f32.gmra.mrb[0].mxu0 %v510
    %v595 = vpop.f32.mrb[0].mxu0
    %v596 = vadd.f32 %v505, %v595
    %v597 = vpop.f32.mrb[0].mxu0
    %598 = vmatprep.mubr.f32.mxu0 0.0
    %599 = vmatmul.mubr.f32.gmra.mrb[0].mxu0 %v513
    %v600 = vpop.f32.mrb[0].mxu0
    %v601 = vadd.f32 %v505, %v600
    %v602 = vpop.f32.mrb[0].mxu0
    %603 = vmatprep.mubr.f32.mxu0 0.0
    %604 = vmatmul.mubr.f32.gmra.mrb[0].mxu0 %v516
    %v605 = vpop.f32.mrb[0].mxu0
    %v606 = vadd.f32 %v505, %v605
    %v607 = vpop.f32.mrb[0].mxu0
    %608 = vmatprep.mubr.f32.mxu0 0.0
    %609 = vmatmul.mubr.f32.gmra.mrb[0].mxu0 %v519
    %v610 = vpop.f32.mrb[0].mxu0
    %v611 = vadd.f32 %v505, %v610
    %v612 = vpop.f32.mrb[0].mxu0
    %613 = vmatprep.mubr.f32.mxu0 0.0
    %614 = vmatmul.mubr.f32.gmra.mrb[0].mxu0 %v522
    %v615 = vpop.f32.mrb[0].mxu0
    %v616 = vadd.f32 %v505, %v615
    %v617 = vpop.f32.mrb[0].mxu0
    %618 = vdwg.mxu0
    %625 = vrot.lane.b32.xlu0 %v591, 96
    %v626 = vpop.permute.xlu0 %625
    %627 = vrot.lane.b32.xlu0 %v596, 96
    %v628 = vpop.permute.xlu0 %627
    %629 = vrot.lane.b32.xlu0 %v601, 96
    %v630 = vpop.permute.xlu0 %629
    %631 = vrot.lane.b32.xlu0 %v606, 96
    %v632 = vpop.permute.xlu0 %631
    %633 = vrot.lane.b32.xlu0 %v611, 96
    %v634 = vpop.permute.xlu0 %633
    %635 = vrot.lane.b32.xlu0 %v616, 96
    %v636 = vpop.permute.xlu0 %635
    %vm637 = vcmask 130048
    %v638 = vsel %vm637, %v591, 0
    %v640 = vsel %vm637, %v596, 0
    %v642 = vsel %vm637, %v601, 0
    %v644 = vsel %vm637, %v606, 0
    %v646 = vsel %vm637, %v611, 0
    %v648 = vsel %vm637, %v616, 0
    %v650 = vsel %vm637, %v626, 0
    %v652 = vsel %vm637, %v628, 0
    %v654 = vsel %vm637, %v630, 0
    %v656 = vsel %vm637, %v632, 0
    %v658 = vsel %vm637, %v634, 0
    %v660 = vsel %vm637, %v636, 0
    %662 = vmatprep.subr.mxu0 0.0
    %663 = vmatpush1.xpose.msra.mxu0 %v650
    %664 = vmatprep.subr.mxu0 0.0
    %665 = vmatpush1.xpose.msra.mxu0 %v652
    %666 = vmatprep.subr.mxu0 0.0
    %667 = vmatpush1.xpose.msra.mxu0 %v654
    %668 = vmatprep.subr.mxu0 0.0
    %669 = vmatpush1.xpose.msra.mxu0 %v656
    %670 = vmatprep.subr.mxu0 0.0
    %671 = vmatpush1.xpose.msra.mxu0 %v658
    %672 = vmatprep.subr.mxu0 0.0
    %673 = vmatpush1.xpose.msra.mxu0 %v660
    %674 = vmatprep.subr.mxu0 0.0
    %675 = vmatpush1.xpose.msra.mxu0 0.0
    %676 = vmatprep.subr.mxu0 0.0
    %677 = vmatpush1.xpose.msra.mxu0 0.0
    %678 = vmatprep.subr.mxu0 0.0
    %679 = vmatpush1.xpose.msra.mxu0 0.0
    %680 = vmatprep.subr.mxu0 0.0
    %681 = vmatpush1.xpose.msra.mxu0 0.0
    %682 = vmatprep.subr.mxu0 0.0
    %683 = vmatpush1.xpose.msra.mxu0 0.0
    %684 = vmatprep.subr.mxu0 0.0
    %685 = vmatpush1.xpose.msra.mxu0 0.0
    %686 = vmatprep.subr.mxu0 0.0
    %687 = vmatpush1.xpose.msra.mxu0 0.0
    %688 = vmatprep.subr.mxu0 0.0
    %689 = vmatpush1.xpose.msra.mxu0 0.0
    %690 = vmatprep.subr.mxu0 0.0
    %691 = vmatpush1.xpose.msra.mxu0 0.0
    %692 = vmatprep.subr.mxu0 0.0
    %693 = vmatpush1.xpose.msra.mxu0 0.0
    %694 = vmatprep.subr.mxu0 0.0
    %695 = vmatpush1.xpose.msra.mxu0 0.0
    %696 = vmatprep.subr.mxu0 0.0
    %697 = vmatpush1.xpose.msra.mxu0 0.0
    %698 = vmatprep.subr.mxu0 0.0
    %699 = vmatpush1.xpose.msra.mxu0 0.0
    %700 = vmatprep.subr.mxu0 0.0
    %701 = vmatpush1.xpose.msra.mxu0 0.0
    %702 = vmatprep.subr.mxu0 0.0
    %703 = vmatpush1.xpose.msra.mxu0 0.0
    %704 = vmatprep.subr.mxu0 0.0
    %705 = vmatpush1.xpose.msra.mxu0 0.0
    %706 = vmatprep.subr.mxu0 0.0
    %707 = vmatpush1.xpose.msra.mxu0 0.0
    %708 = vmatprep.subr.mxu0 0.0
    %709 = vmatpush1.xpose.msra.mxu0 0.0
    %710 = vmatprep.subr.mxu0 0.0
    %711 = vmatpush1.xpose.msra.mxu0 0.0
    %712 = vmatprep.subr.mxu0 0.0
    %713 = vmatpush1.xpose.msra.mxu0 0.0
    %714 = vmatprep.subr.mxu0 0.0
    %715 = vmatpush1.xpose.msra.mxu0 0.0
    %716 = vmatprep.subr.mxu0 0.0
    %717 = vmatpush1.xpose.msra.mxu0 0.0
    %718 = vmatprep.subr.mxu0 0.0
    %719 = vmatpush1.xpose.msra.mxu0 0.0
    %720 = vmatprep.subr.mxu0 0.0
    %721 = vmatpush1.xpose.msra.mxu0 0.0
    %722 = vmatprep.subr.mxu0 0.0
    %723 = vmatpush1.xpose.msra.mxu0 0.0
    %724 = vmatprep.subr.mxu0 0.0
    %725 = vmatpush1.xpose.msra.mxu0 0.0
    %726 = vmatprep.mubr.f32.mxu0 0.0
    %727 = vmatmul.mubr.f32.gmra.mrb[0].mxu0 %v638
    %v728 = vpop.f32.mrb[0].mxu0
    %v729 = vadd.f32 0.0, %v728
    %v730 = vpop.f32.mrb[0].mxu0
    %731 = vmatprep.mubr.f32.mxu0 0.0
    %732 = vmatmul.mubr.f32.gmra.mrb[0].mxu0 %v640
    %v733 = vpop.f32.mrb[0].mxu0
    %v734 = vadd.f32 0.0, %v733
    %v735 = vpop.f32.mrb[0].mxu0
    %736 = vmatprep.mubr.f32.mxu0 0.0
    %737 = vmatmul.mubr.f32.gmra.mrb[0].mxu0 %v642
    %v738 = vpop.f32.mrb[0].mxu0
    %v739 = vadd.f32 0.0, %v738
    %v740 = vpop.f32.mrb[0].mxu0
    %741 = vmatprep.mubr.f32.mxu0 0.0
    %742 = vmatmul.mubr.f32.gmra.mrb[0].mxu0 %v644
    %v743 = vpop.f32.mrb[0].mxu0
    %v744 = vadd.f32 0.0, %v743
    %v745 = vpop.f32.mrb[0].mxu0
    %746 = vmatprep.mubr.f32.mxu0 0.0
    %747 = vmatmul.mubr.f32.gmra.mrb[0].mxu0 %v646
    %v748 = vpop.f32.mrb[0].mxu0
    %v749 = vadd.f32 0.0, %v748
    %v750 = vpop.f32.mrb[0].mxu0
    %751 = vmatprep.mubr.f32.mxu0 0.0
    %752 = vmatmul.mubr.f32.gmra.mrb[0].mxu0 %v648
    %v753 = vpop.f32.mrb[0].mxu0
    %v754 = vadd.f32 0.0, %v753
    %v755 = vpop.f32.mrb[0].mxu0
    %756 = vdwg.mxu0
    %v757 = vmul.f32 %v729, 0.25
    %v758 = vmul.f32 %v734, 0.25
    %v759 = vmul.f32 %v739, 0.25
    %v760 = vmul.f32 %v744, 0.25
    %v761 = vmul.f32 %v749, 0.25
    %v762 = vmul.f32 %v754, 0.25
    %v763 = vadd.f32 %v757, %v242
    %v764 = vadd.f32 %v758, %v243
    %v765 = vadd.f32 %v759, %v244
    %v766 = vadd.f32 %v760, %v245
    %v767 = vadd.f32 %v761, %v246
    %v768 = vadd.f32 %v762, %v247
    %v769 = vsel %vm93, %v763, -inf
    %770 = vmax.xlane.f32.xlu0 %v769
    %v771 = vpop.xlane.xlu0 %770
    %v772 = vsel %vm93, %v764, -inf
    %773 = vmax.xlane.f32.xlu0 %v772
    %v774 = vpop.xlane.xlu0 %773
    %v775 = vsel %vm93, %v765, -inf
    %776 = vmax.xlane.f32.xlu0 %v775
    %v777 = vpop.xlane.xlu0 %776
    %v778 = vsel %vm93, %v766, -inf
    %779 = vmax.xlane.f32.xlu0 %v778
    %v780 = vpop.xlane.xlu0 %779
    %v781 = vsel %vm93, %v767, -inf
    %782 = vmax.xlane.f32.xlu0 %v781
    %v783 = vpop.xlane.xlu0 %782
    %v784 = vsel %vm93, %v768, -inf
    %785 = vmax.xlane.f32.xlu0 %v784
    %v786 = vpop.xlane.xlu0 %785
    %v787 = vsub.f32 %v763, %v771
    %v788 = vsub.f32 %v764, %v774
    %v789 = vsub.f32 %v765, %v777
    %v790 = vsub.f32 %v766, %v780
    %v791 = vsub.f32 %v767, %v783
    %v792 = vsub.f32 %v768, %v786
    %v793 = vmul.f32 %v787, 1.442695
    %v794 = vpow.pop %v793
    %v795 = vmul.f32 %v788, 1.442695
    %v796 = vpow.pop %v795
    %v797 = vmul.f32 %v789, 1.442695
    %v798 = vpow.pop %v797
    %v799 = vmul.f32 %v790, 1.442695
    %v800 = vpow.pop %v799
    %v801 = vmul.f32 %v791, 1.442695
    %v802 = vpow.pop %v801
    %v803 = vmul.f32 %v792, 1.442695
    %v804 = vpow.pop %v803
    %v805 = vsel %vm93, %v794, 0.0
    %806 = vadd.xlane.f32.xlu0 %v805
    %v807 = vpop.xlane.xlu0 %806
    %v808 = vsel %vm93, %v796, 0.0
    %809 = vadd.xlane.f32.xlu0 %v808
    %v810 = vpop.xlane.xlu0 %809
    %v811 = vsel %vm93, %v798, 0.0
    %812 = vadd.xlane.f32.xlu0 %v811
    %v813 = vpop.xlane.xlu0 %812
    %v814 = vsel %vm93, %v800, 0.0
    %815 = vadd.xlane.f32.xlu0 %v814
    %v816 = vpop.xlane.xlu0 %815
    %v817 = vsel %vm93, %v802, 0.0
    %818 = vadd.xlane.f32.xlu0 %v817
    %v819 = vpop.xlane.xlu0 %818
    %v820 = vsel %vm93, %v804, 0.0
    %821 = vadd.xlane.f32.xlu0 %v820
    %v822 = vpop.xlane.xlu0 %821
    %v823 = vrcp.pop %v807
    %v824 = vrcp.pop %v810
    %v825 = vrcp.pop %v813
    %v826 = vrcp.pop %v816
    %v827 = vrcp.pop %v819
    %v828 = vrcp.pop %v822
    %v829 = vmul.f32 %v807, %v823
    %v830 = vmul.f32 %v810, %v824
    %v831 = vmul.f32 %v813, %v825
    %v832 = vmul.f32 %v816, %v826
    %v833 = vmul.f32 %v819, %v827
    %v834 = vmul.f32 %v822, %v828
    %v835 = vsub.f32 2.0, %v829
    %v836 = vsub.f32 2.0, %v830
    %v837 = vsub.f32 2.0, %v831
    %v838 = vsub.f32 2.0, %v832
    %v839 = vsub.f32 2.0, %v833
    %v840 = vsub.f32 2.0, %v834
    %v841 = vmul.f32 %v823, %v835
    %v842 = vmul.f32 %v824, %v836
    %v843 = vmul.f32 %v825, %v837
    %v844 = vmul.f32 %v826, %v838
    %v845 = vmul.f32 %v827, %v839
    %v846 = vmul.f32 %v828, %v840
    %v847 = vmul.f32 %v794, %v841
    %v848 = vmul.f32 %v796, %v842
    %v849 = vmul.f32 %v798, %v843
    %v850 = vmul.f32 %v800, %v844
    %v851 = vmul.f32 %v802, %v845
    %v852 = vmul.f32 %v804, %v846
    %853 = vrot.lane.b32.xlu0 %v591, 64
    %v854 = vpop.permute.xlu0 %853
    %855 = vrot.lane.b32.xlu0 %v596, 64
    %v856 = vpop.permute.xlu0 %855
    %857 = vrot.lane.b32.xlu0 %v601, 64
    %v858 = vpop.permute.xlu0 %857
    %859 = vrot.lane.b32.xlu0 %v606, 64
    %v860 = vpop.permute.xlu0 %859
    %861 = vrot.lane.b32.xlu0 %v611, 64
    %v862 = vpop.permute.xlu0 %861
    %863 = vrot.lane.b32.xlu0 %v616, 64
    %v864 = vpop.permute.xlu0 %863
    %v872 = vsel %vm93, %v847, 0
    %v875 = vsel %vm93, %v848, 0
    %v878 = vsel %vm93, %v849, 0
    %v881 = vsel %vm93, %v850, 0
    %v884 = vsel %vm93, %v851, 0
    %v887 = vsel %vm93, %v852, 0
    %889 = vmatprep.subr.mxu0 0.0
    %890 = vmatpush1.msra.mxu0 %v854
    %891 = vmatprep.subr.mxu0 0.0
    %892 = vmatpush1.msra.mxu0 %v856
    %893 = vmatprep.subr.mxu0 0.0
    %894 = vmatpush1.msra.mxu0 %v858
    %895 = vmatprep.subr.mxu0 0.0
    %896 = vmatpush1.msra.mxu0 %v860
    %897 = vmatprep.subr.mxu0 0.0
    %898 = vmatpush1.msra.mxu0 %v862
    %899 = vmatprep.subr.mxu0 0.0
    %900 = vmatpush1.msra.mxu0 %v864
    %901 = vmatprep.subr.mxu0 0.0
    %902 = vmatpush1.msra.mxu0 0.0
    %903 = vmatprep.subr.mxu0 0.0
    %904 = vmatpush1.msra.mxu0 0.0
    %905 = vmatprep.subr.mxu0 0.0
    %906 = vmatpush1.msra.mxu0 0.0
    %907 = vmatprep.subr.mxu0 0.0
    %908 = vmatpush1.msra.mxu0 0.0
    %909 = vmatprep.subr.mxu0 0.0
    %910 = vmatpush1.msra.mxu0 0.0
    %911 = vmatprep.subr.mxu0 0.0
    %912 = vmatpush1.msra.mxu0 0.0
    %913 = vmatprep.subr.mxu0 0.0
    %914 = vmatpush1.msra.mxu0 0.0
    %915 = vmatprep.subr.mxu0 0.0
    %916 = vmatpush1.msra.mxu0 0.0
    %917 = vmatprep.subr.mxu0 0.0
    %918 = vmatpush1.msra.mxu0 0.0
    %919 = vmatprep.subr.mxu0 0.0
    %920 = vmatpush1.msra.mxu0 0.0
    %921 = vmatprep.subr.mxu0 0.0
    %922 = vmatpush1.msra.mxu0 0.0
    %923 = vmatprep.subr.mxu0 0.0
    %924 = vmatpush1.msra.mxu0 0.0
    %925 = vmatprep.subr.mxu0 0.0
    %926 = vmatpush1.msra.mxu0 0.0
    %927 = vmatprep.subr.mxu0 0.0
    %928 = vmatpush1.msra.mxu0 0.0
    %929 = vmatprep.subr.mxu0 0.0
    %930 = vmatpush1.msra.mxu0 0.0
    %931 = vmatprep.subr.mxu0 0.0
    %932 = vmatpush1.msra.mxu0 0.0
    %933 = vmatprep.subr.mxu0 0.0
    %934 = vmatpush1.msra.mxu0 0.0
    %935 = vmatprep.subr.mxu0 0.0
    %936 = vmatpush1.msra.mxu0 0.0
    %937 = vmatprep.subr.mxu0 0.0
    %938 = vmatpush1.msra.mxu0 0.0
    %939 = vmatprep.subr.mxu0 0.0
    %940 = vmatpush1.msra.mxu0 0.0
    %941 = vmatprep.subr.mxu0 0.0
    %942 = vmatpush1.msra.mxu0 0.0
    %943 = vmatprep.subr.mxu0 0.0
    %944 = vmatpush1.msra.mxu0 0.0
    %945 = vmatprep.subr.mxu0 0.0
    %946 = vmatpush1.msra.mxu0 0.0
    %947 = vmatprep.subr.mxu0 0.0
    %948 = vmatpush1.msra.mxu0 0.0
    %949 = vmatprep.subr.mxu0 0.0
    %950 = vmatpush1.msra.mxu0 0.0
    %951 = vmatprep.subr.mxu0 0.0
    %952 = vmatpush1.msra.mxu0 0.0
    %953 = vmatprep.mubr.f32.mxu0 0.0
    %954 = vmatmul.mubr.f32.gmra.mrb[0].mxu0 %v872
    %v955 = vpop.f32.mrb[0].mxu0
    %v956 = vadd.f32 0.0, %v955
    %v957 = vpop.f32.mrb[0].mxu0
    %958 = vmatprep.mubr.f32.mxu0 0.0
    %959 = vmatmul.mubr.f32.gmra.mrb[0].mxu0 %v875
    %v960 = vpop.f32.mrb[0].mxu0
    %v961 = vadd.f32 0.0, %v960
    %v962 = vpop.f32.mrb[0].mxu0
    %963 = vmatprep.mubr.f32.mxu0 0.0
    %964 = vmatmul.mubr.f32.gmra.mrb[0].mxu0 %v878
    %v965 = vpop.f32.mrb[0].mxu0
    %v966 = vadd.f32 0.0, %v965
    %v967 = vpop.f32.mrb[0].mxu0
    %968 = vmatprep.mubr.f32.mxu0 0.0
    %969 = vmatmul.mubr.f32.gmra.mrb[0].mxu0 %v881
    %v970 = vpop.f32.mrb[0].mxu0
    %v971 = vadd.f32 0.0, %v970
    %v972 = vpop.f32.mrb[0].mxu0
    %973 = vmatprep.mubr.f32.mxu0 0.0
    %974 = vmatmul.mubr.f32.gmra.mrb[0].mxu0 %v884
    %v975 = vpop.f32.mrb[0].mxu0
    %v976 = vadd.f32 0.0, %v975
    %v977 = vpop.f32.mrb[0].mxu0
    %978 = vmatprep.mubr.f32.mxu0 0.0
    %979 = vmatmul.mubr.f32.gmra.mrb[0].mxu0 %v887
    %v980 = vpop.f32.mrb[0].mxu0
    %v981 = vadd.f32 0.0, %v980
    %v982 = vpop.f32.mrb[0].mxu0
    %983 = vdwg.mxu0
    %984 = vrot.lane.b32.xlu0 %v591, 112
    %v985 = vpop.permute.xlu0 %984
    %986 = vrot.lane.b32.xlu0 %v596, 112
    %v987 = vpop.permute.xlu0 %986
    %988 = vrot.lane.b32.xlu0 %v601, 112
    %v989 = vpop.permute.xlu0 %988
    %990 = vrot.lane.b32.xlu0 %v606, 112
    %v991 = vpop.permute.xlu0 %990
    %992 = vrot.lane.b32.xlu0 %v611, 112
    %v993 = vpop.permute.xlu0 %992
    %994 = vrot.lane.b32.xlu0 %v616, 112
    %v995 = vpop.permute.xlu0 %994
    %996 = vrot.lane.b32.xlu0 %v591, 80
    %v997 = vpop.permute.xlu0 %996
    %998 = vrot.lane.b32.xlu0 %v596, 80
    %v999 = vpop.permute.xlu0 %998
    %1000 = vrot.lane.b32.xlu0 %v601, 80
    %v1001 = vpop.permute.xlu0 %1000
    %1002 = vrot.lane.b32.xlu0 %v606, 80
    %v1003 = vpop.permute.xlu0 %1002
    %1004 = vrot.lane.b32.xlu0 %v611, 80
    %v1005 = vpop.permute.xlu0 %1004
    %1006 = vrot.lane.b32.xlu0 %v616, 80
    %v1007 = vpop.permute.xlu0 %1006
    %v1008 = vsel %vm637, %v985, 0
    %v1010 = vsel %vm637, %v987, 0
    %v1012 = vsel %vm637, %v989, 0
    %v1014 = vsel %vm637, %v991, 0
    %v1016 = vsel %vm637, %v993, 0
    %v1018 = vsel %vm637, %v995, 0
    %v1020 = vsel %vm637, %v997, 0
    %v1022 = vsel %vm637, %v999, 0
    %v1024 = vsel %vm637, %v1001, 0
    %v1026 = vsel %vm637, %v1003, 0
    %v1028 = vsel %vm637, %v1005, 0
    %v1030 = vsel %vm637, %v1007, 0
    %1032 = vmatprep.subr.mxu0 0.0
    %1033 = vmatpush1.xpose.msra.mxu0 %v1020
    %1034 = vmatprep.subr.mxu0 0.0
    %1035 = vmatpush1.xpose.msra.mxu0 %v1022
    %1036 = vmatprep.subr.mxu0 0.0
    %1037 = vmatpush1.xpose.msra.mxu0 %v1024
    %1038 = vmatprep.subr.mxu0 0.0
    %1039 = vmatpush1.xpose.msra.mxu0 %v1026
    %1040 = vmatprep.subr.mxu0 0.0
    %1041 = vmatpush1.xpose.msra.mxu0 %v1028
    %1042 = vmatprep.subr.mxu0 0.0
    %1043 = vmatpush1.xpose.msra.mxu0 %v1030
    %1044 = vmatprep.subr.mxu0 0.0
    %1045 = vmatpush1.xpose.msra.mxu0 0.0
    %1046 = vmatprep.subr.mxu0 0.0
    %1047 = vmatpush1.xpose.msra.mxu0 0.0
    %1048 = vmatprep.subr.mxu0 0.0
    %1049 = vmatpush1.xpose.msra.mxu0 0.0
    %1050 = vmatprep.subr.mxu0 0.0
    %1051 = vmatpush1.xpose.msra.mxu0 0.0
    %1052 = vmatprep.subr.mxu0 0.0
    %1053 = vmatpush1.xpose.msra.mxu0 0.0
    %1054 = vmatprep.subr.mxu0 0.0
    %1055 = vmatpush1.xpose.msra.mxu0 0.0
    %1056 = vmatprep.subr.mxu0 0.0
    %1057 = vmatpush1.xpose.msra.mxu0 0.0
    %1058 = vmatprep.subr.mxu0 0.0
    %1059 = vmatpush1.xpose.msra.mxu0 0.0
    %1060 = vmatprep.subr.mxu0 0.0
    %1061 = vmatpush1.xpose.msra.mxu0 0.0
    %1062 = vmatprep.subr.mxu0 0.0
    %1063 = vmatpush1.xpose.msra.mxu0 0.0
    %1064 = vmatprep.subr.mxu0 0.0
    %1065 = vmatpush1.xpose.msra.mxu0 0.0
    %1066 = vmatprep.subr.mxu0 0.0
    %1067 = vmatpush1.xpose.msra.mxu0 0.0
    %1068 = vmatprep.subr.mxu0 0.0
    %1069 = vmatpush1.xpose.msra.mxu0 0.0
    %1070 = vmatprep.subr.mxu0 0.0
    %1071 = vmatpush1.xpose.msra.mxu0 0.0
    %1072 = vmatprep.subr.mxu0 0.0
    %1073 = vmatpush1.xpose.msra.mxu0 0.0
    %1074 = vmatprep.subr.mxu0 0.0
    %1075 = vmatpush1.xpose.msra.mxu0 0.0
    %1076 = vmatprep.subr.mxu0 0.0
    %1077 = vmatpush1.xpose.msra.mxu0 0.0
    %1078 = vmatprep.subr.mxu0 0.0
    %1079 = vmatpush1.xpose.msra.mxu0 0.0
    %1080 = vmatprep.subr.mxu0 0.0
    %1081 = vmatpush1.xpose.msra.mxu0 0.0
    %1082 = vmatprep.subr.mxu0 0.0
    %1083 = vmatpush1.xpose.msra.mxu0 0.0
    %1084 = vmatprep.subr.mxu0 0.0
    %1085 = vmatpush1.xpose.msra.mxu0 0.0
    %1086 = vmatprep.subr.mxu0 0.0
    %1087 = vmatpush1.xpose.msra.mxu0 0.0
    %1088 = vmatprep.subr.mxu0 0.0
    %1089 = vmatpush1.xpose.msra.mxu0 0.0
    %1090 = vmatprep.subr.mxu0 0.0
    %1091 = vmatpush1.xpose.msra.mxu0 0.0
    %1092 = vmatprep.subr.mxu0 0.0
    %1093 = vmatpush1.xpose.msra.mxu0 0.0
    %1094 = vmatprep.subr.mxu0 0.0
    %1095 = vmatpush1.xpose.msra.mxu0 0.0
    %1096 = vmatprep.mubr.f32.mxu0 0.0
    %1097 = vmatmul.mubr.f32.gmra.mrb[0].mxu0 %v1008
    %v1098 = vpop.f32.mrb[0].mxu0
    %v1099 = vadd.f32 0.0, %v1098
    %v1100 = vpop.f32.mrb[0].mxu0
    %1101 = vmatprep.mubr.f32.mxu0 0.0
    %1102 = vmatmul.mubr.f32.gmra.mrb[0].mxu0 %v1010
    %v1103 = vpop.f32.mrb[0].mxu0
    %v1104 = vadd.f32 0.0, %v1103
    %v1105 = vpop.f32.mrb[0].mxu0
    %1106 = vmatprep.mubr.f32.mxu0 0.0
    %1107 = vmatmul.mubr.f32.gmra.mrb[0].mxu0 %v1012
    %v1108 = vpop.f32.mrb[0].mxu0
    %v1109 = vadd.f32 0.0, %v1108
    %v1110 = vpop.f32.mrb[0].mxu0
    %1111 = vmatprep.mubr.f32.mxu0 0.0
    %1112 = vmatmul.mubr.f32.gmra.mrb[0].mxu0 %v1014
    %v1113 = vpop.f32.mrb[0].mxu0
    %v1114 = vadd.f32 0.0, %v1113
    %v1115 = vpop.f32.mrb[0].mxu0
    %1116 = vmatprep.mubr.f32.mxu0 0.0
    %1117 = vmatmul.mubr.f32.gmra.mrb[0].mxu0 %v1016
    %v1118 = vpop.f32.mrb[0].mxu0
    %v1119 = vadd.f32 0.0, %v1118
    %v1120 = vpop.f32.mrb[0].mxu0
    %1121 = vmatprep.mubr.f32.mxu0 0.0
    %1122 = vmatmul.mubr.f32.gmra.mrb[0].mxu0 %v1018
    %v1123 = vpop.f32.mrb[0].mxu0
    %v1124 = vadd.f32 0.0, %v1123
    %v1125 = vpop.f32.mrb[0].mxu0
    %1126 = vdwg.mxu0
    %v1127 = vmul.f32 %v1099, 0.25
    %v1128 = vmul.f32 %v1104, 0.25
    %v1129 = vmul.f32 %v1109, 0.25
    %v1130 = vmul.f32 %v1114, 0.25
    %v1131 = vmul.f32 %v1119, 0.25
    %v1132 = vmul.f32 %v1124, 0.25
    %v1133 = vadd.f32 %v1127, %v242
    %v1134 = vadd.f32 %v1128, %v243
    %v1135 = vadd.f32 %v1129, %v244
    %v1136 = vadd.f32 %v1130, %v245
    %v1137 = vadd.f32 %v1131, %v246
    %v1138 = vadd.f32 %v1132, %v247
    %v1139 = vsel %vm93, %v1133, -inf
    %1140 = vmax.xlane.f32.xlu0 %v1139
    %v1141 = vpop.xlane.xlu0 %1140
    %v1142 = vsel %vm93, %v1134, -inf
    %1143 = vmax.xlane.f32.xlu0 %v1142
    %v1144 = vpop.xlane.xlu0 %1143
    %v1145 = vsel %vm93, %v1135, -inf
    %1146 = vmax.xlane.f32.xlu0 %v1145
    %v1147 = vpop.xlane.xlu0 %1146
    %v1148 = vsel %vm93, %v1136, -inf
    %1149 = vmax.xlane.f32.xlu0 %v1148
    %v1150 = vpop.xlane.xlu0 %1149
    %v1151 = vsel %vm93, %v1137, -inf
    %1152 = vmax.xlane.f32.xlu0 %v1151
    %v1153 = vpop.xlane.xlu0 %1152
    %v1154 = vsel %vm93, %v1138, -inf
    %1155 = vmax.xlane.f32.xlu0 %v1154
    %v1156 = vpop.xlane.xlu0 %1155
    %v1157 = vsub.f32 %v1133, %v1141
    %v1158 = vsub.f32 %v1134, %v1144
    %v1159 = vsub.f32 %v1135, %v1147
    %v1160 = vsub.f32 %v1136, %v1150
    %v1161 = vsub.f32 %v1137, %v1153
    %v1162 = vsub.f32 %v1138, %v1156
    %v1163 = vmul.f32 %v1157, 1.442695
    %v1164 = vpow.pop %v1163
    %v1165 = vmul.f32 %v1158, 1.442695
    %v1166 = vpow.pop %v1165
    %v1167 = vmul.f32 %v1159, 1.442695
    %v1168 = vpow.pop %v1167
    %v1169 = vmul.f32 %v1160, 1.442695
    %v1170 = vpow.pop %v1169
    %v1171 = vmul.f32 %v1161, 1.442695
    %v1172 = vpow.pop %v1171
    %v1173 = vmul.f32 %v1162, 1.442695
    %v1174 = vpow.pop %v1173
    %v1175 = vsel %vm93, %v1164, 0.0
    %1176 = vadd.xlane.f32.xlu0 %v1175
    %v1177 = vpop.xlane.xlu0 %1176
    %v1178 = vsel %vm93, %v1166, 0.0
    %1179 = vadd.xlane.f32.xlu0 %v1178
    %v1180 = vpop.xlane.xlu0 %1179
    %v1181 = vsel %vm93, %v1168, 0.0
    %1182 = vadd.xlane.f32.xlu0 %v1181
    %v1183 = vpop.xlane.xlu0 %1182
    %v1184 = vsel %vm93, %v1170, 0.0
    %1185 = vadd.xlane.f32.xlu0 %v1184
    %v1186 = vpop.xlane.xlu0 %1185
    %v1187 = vsel %vm93, %v1172, 0.0
    %1188 = vadd.xlane.f32.xlu0 %v1187
    %v1189 = vpop.xlane.xlu0 %1188
    %v1190 = vsel %vm93, %v1174, 0.0
    %1191 = vadd.xlane.f32.xlu0 %v1190
    %v1192 = vpop.xlane.xlu0 %1191
    %v1193 = vrcp.pop %v1177
    %v1194 = vrcp.pop %v1180
    %v1195 = vrcp.pop %v1183
    %v1196 = vrcp.pop %v1186
    %v1197 = vrcp.pop %v1189
    %v1198 = vrcp.pop %v1192
    %v1199 = vmul.f32 %v1177, %v1193
    %v1200 = vmul.f32 %v1180, %v1194
    %v1201 = vmul.f32 %v1183, %v1195
    %v1202 = vmul.f32 %v1186, %v1196
    %v1203 = vmul.f32 %v1189, %v1197
    %v1204 = vmul.f32 %v1192, %v1198
    %v1205 = vsub.f32 2.0, %v1199
    %v1206 = vsub.f32 2.0, %v1200
    %v1207 = vsub.f32 2.0, %v1201
    %v1208 = vsub.f32 2.0, %v1202
    %v1209 = vsub.f32 2.0, %v1203
    %v1210 = vsub.f32 2.0, %v1204
    %v1211 = vmul.f32 %v1193, %v1205
    %v1212 = vmul.f32 %v1194, %v1206
    %v1213 = vmul.f32 %v1195, %v1207
    %v1214 = vmul.f32 %v1196, %v1208
    %v1215 = vmul.f32 %v1197, %v1209
    %v1216 = vmul.f32 %v1198, %v1210
    %v1217 = vmul.f32 %v1164, %v1211
    %v1218 = vmul.f32 %v1166, %v1212
    %v1219 = vmul.f32 %v1168, %v1213
    %v1220 = vmul.f32 %v1170, %v1214
    %v1221 = vmul.f32 %v1172, %v1215
    %v1222 = vmul.f32 %v1174, %v1216
    %1223 = vrot.lane.b32.xlu0 %v591, 48
    %v1224 = vpop.permute.xlu0 %1223
    %1225 = vrot.lane.b32.xlu0 %v596, 48
    %v1226 = vpop.permute.xlu0 %1225
    %1227 = vrot.lane.b32.xlu0 %v601, 48
    %v1228 = vpop.permute.xlu0 %1227
    %1229 = vrot.lane.b32.xlu0 %v606, 48
    %v1230 = vpop.permute.xlu0 %1229
    %1231 = vrot.lane.b32.xlu0 %v611, 48
    %v1232 = vpop.permute.xlu0 %1231
    %1233 = vrot.lane.b32.xlu0 %v616, 48
    %v1234 = vpop.permute.xlu0 %1233
    %v1242 = vsel %vm93, %v1217, 0
    %v1245 = vsel %vm93, %v1218, 0
    %v1248 = vsel %vm93, %v1219, 0
    %v1251 = vsel %vm93, %v1220, 0
    %v1254 = vsel %vm93, %v1221, 0
    %v1257 = vsel %vm93, %v1222, 0
    %1259 = vmatprep.subr.mxu0 0.0
    %1260 = vmatpush1.msra.mxu0 %v1224
    %1261 = vmatprep.subr.mxu0 0.0
    %1262 = vmatpush1.msra.mxu0 %v1226
    %1263 = vmatprep.subr.mxu0 0.0
    %1264 = vmatpush1.msra.mxu0 %v1228
    %1265 = vmatprep.subr.mxu0 0.0
    %1266 = vmatpush1.msra.mxu0 %v1230
    %1267 = vmatprep.subr.mxu0 0.0
    %1268 = vmatpush1.msra.mxu0 %v1232
    %1269 = vmatprep.subr.mxu0 0.0
    %1270 = vmatpush1.msra.mxu0 %v1234
    %1271 = vmatprep.subr.mxu0 0.0
    %1272 = vmatpush1.msra.mxu0 0.0
    %1273 = vmatprep.subr.mxu0 0.0
    %1274 = vmatpush1.msra.mxu0 0.0
    %1275 = vmatprep.subr.mxu0 0.0
    %1276 = vmatpush1.msra.mxu0 0.0
    %1277 = vmatprep.subr.mxu0 0.0
    %1278 = vmatpush1.msra.mxu0 0.0
    %1279 = vmatprep.subr.mxu0 0.0
    %1280 = vmatpush1.msra.mxu0 0.0
    %1281 = vmatprep.subr.mxu0 0.0
    %1282 = vmatpush1.msra.mxu0 0.0
    %1283 = vmatprep.subr.mxu0 0.0
    %1284 = vmatpush1.msra.mxu0 0.0
    %1285 = vmatprep.subr.mxu0 0.0
    %1286 = vmatpush1.msra.mxu0 0.0
    %1287 = vmatprep.subr.mxu0 0.0
    %1288 = vmatpush1.msra.mxu0 0.0
    %1289 = vmatprep.subr.mxu0 0.0
    %1290 = vmatpush1.msra.mxu0 0.0
    %1291 = vmatprep.subr.mxu0 0.0
    %1292 = vmatpush1.msra.mxu0 0.0
    %1293 = vmatprep.subr.mxu0 0.0
    %1294 = vmatpush1.msra.mxu0 0.0
    %1295 = vmatprep.subr.mxu0 0.0
    %1296 = vmatpush1.msra.mxu0 0.0
    %1297 = vmatprep.subr.mxu0 0.0
    %1298 = vmatpush1.msra.mxu0 0.0
    %1299 = vmatprep.subr.mxu0 0.0
    %1300 = vmatpush1.msra.mxu0 0.0
    %1301 = vmatprep.subr.mxu0 0.0
    %1302 = vmatpush1.msra.mxu0 0.0
    %1303 = vmatprep.subr.mxu0 0.0
    %1304 = vmatpush1.msra.mxu0 0.0
    %1305 = vmatprep.subr.mxu0 0.0
    %1306 = vmatpush1.msra.mxu0 0.0
    %1307 = vmatprep.subr.mxu0 0.0
    %1308 = vmatpush1.msra.mxu0 0.0
    %1309 = vmatprep.subr.mxu0 0.0
    %1310 = vmatpush1.msra.mxu0 0.0
    %1311 = vmatprep.subr.mxu0 0.0
    %1312 = vmatpush1.msra.mxu0 0.0
    %1313 = vmatprep.subr.mxu0 0.0
    %1314 = vmatpush1.msra.mxu0 0.0
    %1315 = vmatprep.subr.mxu0 0.0
    %1316 = vmatpush1.msra.mxu0 0.0
    %1317 = vmatprep.subr.mxu0 0.0
    %1318 = vmatpush1.msra.mxu0 0.0
    %1319 = vmatprep.subr.mxu0 0.0
    %1320 = vmatpush1.msra.mxu0 0.0
    %1321 = vmatprep.subr.mxu0 0.0
    %1322 = vmatpush1.msra.mxu0 0.0
    %1323 = vmatprep.mubr.f32.mxu0 0.0
    %1324 = vmatmul.mubr.f32.gmra.mrb[0].mxu0 %v1242
    %v1325 = vpop.f32.mrb[0].mxu0
    %v1326 = vadd.f32 0.0, %v1325
    %v1327 = vpop.f32.mrb[0].mxu0
    %1328 = vmatprep.mubr.f32.mxu0 0.0
    %1329 = vmatmul.mubr.f32.gmra.mrb[0].mxu0 %v1245
    %v1330 = vpop.f32.mrb[0].mxu0
    %v1331 = vadd.f32 0.0, %v1330
    %v1332 = vpop.f32.mrb[0].mxu0
    %1333 = vmatprep.mubr.f32.mxu0 0.0
    %1334 = vmatmul.mubr.f32.gmra.mrb[0].mxu0 %v1248
    %v1335 = vpop.f32.mrb[0].mxu0
    %v1336 = vadd.f32 0.0, %v1335
    %v1337 = vpop.f32.mrb[0].mxu0
    %1338 = vmatprep.mubr.f32.mxu0 0.0
    %1339 = vmatmul.mubr.f32.gmra.mrb[0].mxu0 %v1251
    %v1340 = vpop.f32.mrb[0].mxu0
    %v1341 = vadd.f32 0.0, %v1340
    %v1342 = vpop.f32.mrb[0].mxu0
    %1343 = vmatprep.mubr.f32.mxu0 0.0
    %1344 = vmatmul.mubr.f32.gmra.mrb[0].mxu0 %v1254
    %v1345 = vpop.f32.mrb[0].mxu0
    %v1346 = vadd.f32 0.0, %v1345
    %v1347 = vpop.f32.mrb[0].mxu0
    %1348 = vmatprep.mubr.f32.mxu0 0.0
    %1349 = vmatmul.mubr.f32.gmra.mrb[0].mxu0 %v1257
    %v1350 = vpop.f32.mrb[0].mxu0
    %v1351 = vadd.f32 0.0, %v1350
    %v1352 = vpop.f32.mrb[0].mxu0
    %1353 = vdwg.mxu0
    %1360 = vrot.lane.b32.xlu0 %v1326, 16
    %v1361 = vpop.permute.xlu0 %1360
    %1362 = vrot.lane.b32.xlu0 %v1331, 16
    %v1363 = vpop.permute.xlu0 %1362
    %1364 = vrot.lane.b32.xlu0 %v1336, 16
    %v1365 = vpop.permute.xlu0 %1364
    %1366 = vrot.lane.b32.xlu0 %v1341, 16
    %v1367 = vpop.permute.xlu0 %1366
    %1368 = vrot.lane.b32.xlu0 %v1346, 16
    %v1369 = vpop.permute.xlu0 %1368
    %1370 = vrot.lane.b32.xlu0 %v1351, 16
    %v1371 = vpop.permute.xlu0 %1370
    %v1378 = vsel %vm637, %v956, %v1361
    %v1379 = vsel %vm637, %v961, %v1363
    %v1380 = vsel %vm637, %v966, %v1365
    %v1381 = vsel %vm637, %v971, %v1367
    %v1382 = vsel %vm637, %v976, %v1369
    %v1383 = vsel %vm637, %v981, %v1371
    %v1385 = vsel %vm390, %v1378, 0
    %v1388 = vsel %vm390, %v1379, 0
    %v1391 = vsel %vm390, %v1380, 0
    %v1394 = vsel %vm390, %v1381, 0
    %v1397 = vsel %vm390, %v1382, 0
    %v1400 = vsel %vm390, %v1383, 0
    %1402 = vmatprep.subr.mxu0 0.0
    %1403 = vmatpush1.msra.mxu0 %v273
    %1404 = vmatprep.subr.mxu0 0.0
    %1405 = vmatpush1.msra.mxu0 %v274
    %1406 = vmatprep.subr.mxu0 0.0
    %1407 = vmatpush1.msra.mxu0 %v275
    %1408 = vmatprep.subr.mxu0 0.0
    %1409 = vmatpush1.msra.mxu0 %v276
    %1410 = vmatprep.subr.mxu0 0.0
    %1411 = vmatpush1.msra.mxu0 0.0
    %1412 = vmatprep.subr.mxu0 0.0
    %1413 = vmatpush1.msra.mxu0 0.0
    %1414 = vmatprep.subr.mxu0 0.0
    %1415 = vmatpush1.msra.mxu0 0.0
    %1416 = vmatprep.subr.mxu0 0.0
    %1417 = vmatpush1.msra.mxu0 0.0
    %1418 = vmatprep.subr.mxu0 0.0
    %1419 = vmatpush1.msra.mxu0 0.0
    %1420 = vmatprep.subr.mxu0 0.0
    %1421 = vmatpush1.msra.mxu0 0.0
    %1422 = vmatprep.subr.mxu0 0.0
    %1423 = vmatpush1.msra.mxu0 0.0
    %1424 = vmatprep.subr.mxu0 0.0
    %1425 = vmatpush1.msra.mxu0 0.0
    %1426 = vmatprep.subr.mxu0 0.0
    %1427 = vmatpush1.msra.mxu0 0.0
    %1428 = vmatprep.subr.mxu0 0.0
    %1429 = vmatpush1.msra.mxu0 0.0
    %1430 = vmatprep.subr.mxu0 0.0
    %1431 = vmatpush1.msra.mxu0 0.0
    %1432 = vmatprep.subr.mxu0 0.0
    %1433 = vmatpush1.msra.mxu0 0.0
    %1434 = vmatprep.subr.mxu0 0.0
    %1435 = vmatpush1.msra.mxu0 0.0
    %1436 = vmatprep.subr.mxu0 0.0
    %1437 = vmatpush1.msra.mxu0 0.0
    %1438 = vmatprep.subr.mxu0 0.0
    %1439 = vmatpush1.msra.mxu0 0.0
    %1440 = vmatprep.subr.mxu0 0.0
    %1441 = vmatpush1.msra.mxu0 0.0
    %1442 = vmatprep.subr.mxu0 0.0
    %1443 = vmatpush1.msra.mxu0 0.0
    %1444 = vmatprep.subr.mxu0 0.0
    %1445 = vmatpush1.msra.mxu0 0.0
    %1446 = vmatprep.subr.mxu0 0.0
    %1447 = vmatpush1.msra.mxu0 0.0
    %1448 = vmatprep.subr.mxu0 0.0
    %1449 = vmatpush1.msra.mxu0 0.0
    %1450 = vmatprep.subr.mxu0 0.0
    %1451 = vmatpush1.msra.mxu0 0.0
    %1452 = vmatprep.subr.mxu0 0.0
    %1453 = vmatpush1.msra.mxu0 0.0
    %1454 = vmatprep.subr.mxu0 0.0
    %1455 = vmatpush1.msra.mxu0 0.0
    %1456 = vmatprep.subr.mxu0 0.0
    %1457 = vmatpush1.msra.mxu0 0.0
    %1458 = vmatprep.subr.mxu0 0.0
    %1459 = vmatpush1.msra.mxu0 0.0
    %1460 = vmatprep.subr.mxu0 0.0
    %1461 = vmatpush1.msra.mxu0 0.0
    %1462 = vmatprep.subr.mxu0 0.0
    %1463 = vmatpush1.msra.mxu0 0.0
    %1464 = vmatprep.subr.mxu0 0.0
    %1465 = vmatpush1.msra.mxu0 0.0
    %1466 = vmatprep.mubr.f32.mxu0 0.0
    %1467 = vmatmul.mubr.f32.gmra.mrb[0].mxu0 %v1385
    %v1468 = vpop.f32.mrb[0].mxu0
    %v1469 = vadd.f32 0.0, %v1468
    %v1470 = vpop.f32.mrb[0].mxu0
    %1471 = vmatprep.mubr.f32.mxu0 0.0
    %1472 = vmatmul.mubr.f32.gmra.mrb[0].mxu0 %v1388
    %v1473 = vpop.f32.mrb[0].mxu0
    %v1474 = vadd.f32 0.0, %v1473
    %v1475 = vpop.f32.mrb[0].mxu0
    %1476 = vmatprep.mubr.f32.mxu0 0.0
    %1477 = vmatmul.mubr.f32.gmra.mrb[0].mxu0 %v1391
    %v1478 = vpop.f32.mrb[0].mxu0
    %v1479 = vadd.f32 0.0, %v1478
    %v1480 = vpop.f32.mrb[0].mxu0
    %1481 = vmatprep.mubr.f32.mxu0 0.0
    %1482 = vmatmul.mubr.f32.gmra.mrb[0].mxu0 %v1394
    %v1483 = vpop.f32.mrb[0].mxu0
    %v1484 = vadd.f32 0.0, %v1483
    %v1485 = vpop.f32.mrb[0].mxu0
    %1486 = vmatprep.mubr.f32.mxu0 0.0
    %1487 = vmatmul.mubr.f32.gmra.mrb[0].mxu0 %v1397
    %v1488 = vpop.f32.mrb[0].mxu0
    %v1489 = vadd.f32 0.0, %v1488
    %v1490 = vpop.f32.mrb[0].mxu0
    %1491 = vmatprep.mubr.f32.mxu0 0.0
    %1492 = vmatmul.mubr.f32.gmra.mrb[0].mxu0 %v1400
    %v1493 = vpop.f32.mrb[0].mxu0
    %v1494 = vadd.f32 0.0, %v1493
    %v1495 = vpop.f32.mrb[0].mxu0
    %1496 = vdwg.mxu0
    %v1497 = vadd.f32 %v362, %v1469
    %v1498 = vadd.f32 %v367, %v1474
    %v1499 = vadd.f32 %v372, %v1479
    %v1500 = vadd.f32 %v377, %v1484
    %v1501 = vadd.f32 %v382, %v1489
    %v1502 = vadd.f32 %v387, %v1494
    %v1503 = vlaneseq
    %v1504 = vshrl.u32 %v1503, 7
    %v1505 = vsub.s32 0, %v1504
    %v1506 = vrot.slane %v249, %v1505
    %v1507 = vadd.f32 %v1497, %v1506
    %v1508 = vadd.f32 %v1498, %v1506
    %v1509 = vadd.f32 %v1499, %v1506
    %v1510 = vadd.f32 %v1500, %v1506
    %v1511 = vadd.f32 %v1501, %v1506
    %v1512 = vadd.f32 %v1502, %v1506
    %v1513 = vsel %vm390, %v1507, 0.0
    %1514 = vadd.xlane.f32.xlu0 %v1513
    %v1515 = vpop.xlane.xlu0 %1514
    %v1516 = vsel %vm390, %v1508, 0.0
    %1517 = vadd.xlane.f32.xlu0 %v1516
    %v1518 = vpop.xlane.xlu0 %1517
    %v1519 = vsel %vm390, %v1509, 0.0
    %1520 = vadd.xlane.f32.xlu0 %v1519
    %v1521 = vpop.xlane.xlu0 %1520
    %v1522 = vsel %vm390, %v1510, 0.0
    %1523 = vadd.xlane.f32.xlu0 %v1522
    %v1524 = vpop.xlane.xlu0 %1523
    %v1525 = vsel %vm390, %v1511, 0.0
    %1526 = vadd.xlane.f32.xlu0 %v1525
    %v1527 = vpop.xlane.xlu0 %1526
    %v1528 = vsel %vm390, %v1512, 0.0
    %1529 = vadd.xlane.f32.xlu0 %v1528
    %v1530 = vpop.xlane.xlu0 %1529
    %v1531 = vmul.f32 %v1515, %v409
    %v1532 = vmul.f32 %v1518, %v409
    %v1533 = vmul.f32 %v1521, %v409
    %v1534 = vmul.f32 %v1524, %v409
    %v1535 = vmul.f32 %v1527, %v409
    %v1536 = vmul.f32 %v1530, %v409
    %v1537 = vmul.f32 %v1507, %v1507
    %v1538 = vmul.f32 %v1508, %v1508
    %v1539 = vmul.f32 %v1509, %v1509
    %v1540 = vmul.f32 %v1510, %v1510
    %v1541 = vmul.f32 %v1511, %v1511
    %v1542 = vmul.f32 %v1512, %v1512
    %v1543 = vsel %vm390, %v1537, 0.0
    %1544 = vadd.xlane.f32.xlu0 %v1543
    %v1545 = vpop.xlane.xlu0 %1544
    %v1546 = vsel %vm390, %v1538, 0.0
    %1547 = vadd.xlane.f32.xlu0 %v1546
    %v1548 = vpop.xlane.xlu0 %1547
    %v1549 = vsel %vm390, %v1539, 0.0
    %1550 = vadd.xlane.f32.xlu0 %v1549
    %v1551 = vpop.xlane.xlu0 %1550
    %v1552 = vsel %vm390, %v1540, 0.0
    %1553 = vadd.xlane.f32.xlu0 %v1552
    %v1554 = vpop.xlane.xlu0 %1553
    %v1555 = vsel %vm390, %v1541, 0.0
    %1556 = vadd.xlane.f32.xlu0 %v1555
    %v1557 = vpop.xlane.xlu0 %1556
    %v1558 = vsel %vm390, %v1542, 0.0
    %1559 = vadd.xlane.f32.xlu0 %v1558
    %v1560 = vpop.xlane.xlu0 %1559
    %v1561 = vmul.f32 %v1545, %v409
    %v1562 = vmul.f32 %v1548, %v409
    %v1563 = vmul.f32 %v1551, %v409
    %v1564 = vmul.f32 %v1554, %v409
    %v1565 = vmul.f32 %v1557, %v409
    %v1566 = vmul.f32 %v1560, %v409
    %v1567 = vmul.f32 %v1531, %v1531
    %v1568 = vmul.f32 %v1532, %v1532
    %v1569 = vmul.f32 %v1533, %v1533
    %v1570 = vmul.f32 %v1534, %v1534
    %v1571 = vmul.f32 %v1535, %v1535
    %v1572 = vmul.f32 %v1536, %v1536
    %v1573 = vsub.f32 %v1561, %v1567
    %v1574 = vsub.f32 %v1562, %v1568
    %v1575 = vsub.f32 %v1563, %v1569
    %v1576 = vsub.f32 %v1564, %v1570
    %v1577 = vsub.f32 %v1565, %v1571
    %v1578 = vsub.f32 %v1566, %v1572
    %v1579 = vsub.f32 %v1507, %v1531
    %v1580 = vsub.f32 %v1508, %v1532
    %v1581 = vsub.f32 %v1509, %v1533
    %v1582 = vsub.f32 %v1510, %v1534
    %v1583 = vsub.f32 %v1511, %v1535
    %v1584 = vsub.f32 %v1512, %v1536
    %v1585 = vadd.f32 %v1573, 1e-06
    %v1586 = vadd.f32 %v1574, 1e-06
    %v1587 = vadd.f32 %v1575, 1e-06
    %v1588 = vadd.f32 %v1576, 1e-06
    %v1589 = vadd.f32 %v1577, 1e-06
    %v1590 = vadd.f32 %v1578, 1e-06
    %v1591 = vrsqrt.pop %v1585
    %v1592 = vrsqrt.pop %v1586
    %v1593 = vrsqrt.pop %v1587
    %v1594 = vrsqrt.pop %v1588
    %v1595 = vrsqrt.pop %v1589
    %v1596 = vrsqrt.pop %v1590
    %v1597 = vmul.f32 %v1579, %v1591
    %v1598 = vmul.f32 %v1580, %v1592
    %v1599 = vmul.f32 %v1581, %v1593
    %v1600 = vmul.f32 %v1582, %v1594
    %v1601 = vmul.f32 %v1583, %v1595
    %v1602 = vmul.f32 %v1584, %v1596
    %v1603 = vlaneseq
    %v1604 = vshrl.u32 %v1603, 7
    %v1605 = vsub.s32 2, %v1604
    %v1606 = vrot.slane %v252, %v1605
    %v1607 = vmul.f32 %v1597, %v1606
    %v1608 = vmul.f32 %v1598, %v1606
    %v1609 = vmul.f32 %v1599, %v1606
    %v1610 = vmul.f32 %v1600, %v1606
    %v1611 = vmul.f32 %v1601, %v1606
    %v1612 = vmul.f32 %v1602, %v1606
    %v1613 = vlaneseq
    %v1614 = vshrl.u32 %v1613, 7
    %v1615 = vsub.s32 3, %v1614
    %v1616 = vrot.slane %v252, %v1615
    %v1617 = vadd.f32 %v1607, %v1616
    %v1618 = vadd.f32 %v1608, %v1616
    %v1619 = vadd.f32 %v1609, %v1616
    %v1620 = vadd.f32 %v1610, %v1616
    %v1621 = vadd.f32 %v1611, %v1616
    %v1622 = vadd.f32 %v1612, %v1616
    %v1623 = vlaneseq
    %v1624 = vshrl.u32 %v1623, 7
    %v1625 = vsub.s32 0, %v1624
    %v1626 = vrot.slane %v250, %v1625
    %v1628 = vsel %vm390, %v1617, 0
    %v1631 = vsel %vm390, %v1618, 0
    %v1634 = vsel %vm390, %v1619, 0
    %v1637 = vsel %vm390, %v1620, 0
    %v1640 = vsel %vm390, %v1621, 0
    %v1643 = vsel %vm390, %v1622, 0
    %1645 = vmatprep.subr.mxu0 0.0
    %1646 = vmatpush1.msra.mxu0 %v269
    %1647 = vmatprep.subr.mxu0 0.0
    %1648 = vmatpush1.msra.mxu0 %v270
    %1649 = vmatprep.subr.mxu0 0.0
    %1650 = vmatpush1.msra.mxu0 %v271
    %1651 = vmatprep.subr.mxu0 0.0
    %1652 = vmatpush1.msra.mxu0 %v272
    %1653 = vmatprep.subr.mxu0 0.0
    %1654 = vmatpush1.msra.mxu0 0.0
    %1655 = vmatprep.subr.mxu0 0.0
    %1656 = vmatpush1.msra.mxu0 0.0
    %1657 = vmatprep.subr.mxu0 0.0
    %1658 = vmatpush1.msra.mxu0 0.0
    %1659 = vmatprep.subr.mxu0 0.0
    %1660 = vmatpush1.msra.mxu0 0.0
    %1661 = vmatprep.subr.mxu0 0.0
    %1662 = vmatpush1.msra.mxu0 0.0
    %1663 = vmatprep.subr.mxu0 0.0
    %1664 = vmatpush1.msra.mxu0 0.0
    %1665 = vmatprep.subr.mxu0 0.0
    %1666 = vmatpush1.msra.mxu0 0.0
    %1667 = vmatprep.subr.mxu0 0.0
    %1668 = vmatpush1.msra.mxu0 0.0
    %1669 = vmatprep.subr.mxu0 0.0
    %1670 = vmatpush1.msra.mxu0 0.0
    %1671 = vmatprep.subr.mxu0 0.0
    %1672 = vmatpush1.msra.mxu0 0.0
    %1673 = vmatprep.subr.mxu0 0.0
    %1674 = vmatpush1.msra.mxu0 0.0
    %1675 = vmatprep.subr.mxu0 0.0
    %1676 = vmatpush1.msra.mxu0 0.0
    %1677 = vmatprep.subr.mxu0 0.0
    %1678 = vmatpush1.msra.mxu0 0.0
    %1679 = vmatprep.subr.mxu0 0.0
    %1680 = vmatpush1.msra.mxu0 0.0
    %1681 = vmatprep.subr.mxu0 0.0
    %1682 = vmatpush1.msra.mxu0 0.0
    %1683 = vmatprep.subr.mxu0 0.0
    %1684 = vmatpush1.msra.mxu0 0.0
    %1685 = vmatprep.subr.mxu0 0.0
    %1686 = vmatpush1.msra.mxu0 0.0
    %1687 = vmatprep.subr.mxu0 0.0
    %1688 = vmatpush1.msra.mxu0 0.0
    %1689 = vmatprep.subr.mxu0 0.0
    %1690 = vmatpush1.msra.mxu0 0.0
    %1691 = vmatprep.subr.mxu0 0.0
    %1692 = vmatpush1.msra.mxu0 0.0
    %1693 = vmatprep.subr.mxu0 0.0
    %1694 = vmatpush1.msra.mxu0 0.0
    %1695 = vmatprep.subr.mxu0 0.0
    %1696 = vmatpush1.msra.mxu0 0.0
    %1697 = vmatprep.subr.mxu0 0.0
    %1698 = vmatpush1.msra.mxu0 0.0
    %1699 = vmatprep.subr.mxu0 0.0
    %1700 = vmatpush1.msra.mxu0 0.0
    %1701 = vmatprep.subr.mxu0 0.0
    %1702 = vmatpush1.msra.mxu0 0.0
    %1703 = vmatprep.subr.mxu0 0.0
    %1704 = vmatpush1.msra.mxu0 0.0
    %1705 = vmatprep.subr.mxu0 0.0
    %1706 = vmatpush1.msra.mxu0 0.0
    %1707 = vmatprep.subr.mxu0 0.0
    %1708 = vmatpush1.msra.mxu0 0.0
    %1709 = vmatprep.mubr.f32.mxu0 0.0
    %1710 = vmatmul.mubr.f32.gmra.mrb[0].mxu0 %v1628
    %v1711 = vpop.f32.mrb[0].mxu0
    %v1712 = vadd.f32 %v1626, %v1711
    %v1713 = vpop.f32.mrb[0].mxu0
    %1714 = vmatprep.mubr.f32.mxu0 0.0
    %1715 = vmatmul.mubr.f32.gmra.mrb[0].mxu0 %v1631
    %v1716 = vpop.f32.mrb[0].mxu0
    %v1717 = vadd.f32 %v1626, %v1716
    %v1718 = vpop.f32.mrb[0].mxu0
    %1719 = vmatprep.mubr.f32.mxu0 0.0
    %1720 = vmatmul.mubr.f32.gmra.mrb[0].mxu0 %v1634
    %v1721 = vpop.f32.mrb[0].mxu0
    %v1722 = vadd.f32 %v1626, %v1721
    %v1723 = vpop.f32.mrb[0].mxu0
    %1724 = vmatprep.mubr.f32.mxu0 0.0
    %1725 = vmatmul.mubr.f32.gmra.mrb[0].mxu0 %v1637
    %v1726 = vpop.f32.mrb[0].mxu0
    %v1727 = vadd.f32 %v1626, %v1726
    %v1728 = vpop.f32.mrb[0].mxu0
    %1729 = vmatprep.mubr.f32.mxu0 0.0
    %1730 = vmatmul.mubr.f32.gmra.mrb[0].mxu0 %v1640
    %v1731 = vpop.f32.mrb[0].mxu0
    %v1732 = vadd.f32 %v1626, %v1731
    %v1733 = vpop.f32.mrb[0].mxu0
    %1734 = vmatprep.mubr.f32.mxu0 0.0
    %1735 = vmatmul.mubr.f32.gmra.mrb[0].mxu0 %v1643
    %v1736 = vpop.f32.mrb[0].mxu0
    %v1737 = vadd.f32 %v1626, %v1736
    %v1738 = vpop.f32.mrb[0].mxu0
    %1739 = vdwg.mxu0
    %v1740 = vmul.f32 %v1712, 0.5
    %v1741 = vmul.f32 %v1717, 0.5
    %v1742 = vmul.f32 %v1722, 0.5
    %v1743 = vmul.f32 %v1727, 0.5
    %v1744 = vmul.f32 %v1732, 0.5
    %v1745 = vmul.f32 %v1737, 0.5
    %v1746 = vmul.f32 %v1712, 0.70710677
    %v1747 = vmul.f32 %v1717, 0.70710677
    %v1748 = vmul.f32 %v1722, 0.70710677
    %v1749 = vmul.f32 %v1727, 0.70710677
    %v1750 = vmul.f32 %v1732, 0.70710677
    %v1751 = vmul.f32 %v1737, 0.70710677
    %vm1752 = vcmp.ge.f32.partialorder %v1746, 0.0
    %vm1753 = vcmp.ge.f32.partialorder %v1747, 0.0
    %vm1754 = vcmp.ge.f32.partialorder %v1748, 0.0
    %vm1755 = vcmp.ge.f32.partialorder %v1749, 0.0
    %vm1756 = vcmp.ge.f32.partialorder %v1750, 0.0
    %vm1757 = vcmp.ge.f32.partialorder %v1751, 0.0
    %v1758 = vsel %vm1752, 1.0, -1.0
    %v1759 = vsel %vm1753, 1.0, -1.0
    %v1760 = vsel %vm1754, 1.0, -1.0
    %v1761 = vsel %vm1755, 1.0, -1.0
    %v1762 = vsel %vm1756, 1.0, -1.0
    %v1763 = vsel %vm1757, 1.0, -1.0
    %v1764 = vand.u32 2147483647, %v1746
    %v1765 = vand.u32 2147483647, %v1747
    %v1766 = vand.u32 2147483647, %v1748
    %v1767 = vand.u32 2147483647, %v1749
    %v1768 = vand.u32 2147483647, %v1750
    %v1769 = vand.u32 2147483647, %v1751
    %v1770 = vmul.f32 %v1764, 0.3275911
    %v1771 = vmul.f32 %v1765, 0.3275911
    %v1772 = vmul.f32 %v1766, 0.3275911
    %v1773 = vmul.f32 %v1767, 0.3275911
    %v1774 = vmul.f32 %v1768, 0.3275911
    %v1775 = vmul.f32 %v1769, 0.3275911
    %v1776 = vadd.f32 %v1770, 1.0
    %v1777 = vadd.f32 %v1771, 1.0
    %v1778 = vadd.f32 %v1772, 1.0
    %v1779 = vadd.f32 %v1773, 1.0
    %v1780 = vadd.f32 %v1774, 1.0
    %v1781 = vadd.f32 %v1775, 1.0
    %v1782 = vrcp.pop %v1776
    %v1783 = vrcp.pop %v1777
    %v1784 = vrcp.pop %v1778
    %v1785 = vrcp.pop %v1779
    %v1786 = vrcp.pop %v1780
    %v1787 = vrcp.pop %v1781
    %v1788 = vmul.f32 %v1782, 1.0614054
    %v1789 = vmul.f32 %v1783, 1.0614054
    %v1790 = vmul.f32 %v1784, 1.0614054
    %v1791 = vmul.f32 %v1785, 1.0614054
    %v1792 = vmul.f32 %v1786, 1.0614054
    %v1793 = vmul.f32 %v1787, 1.0614054
    %v1794 = vadd.f32 %v1788, -1.4531521
    %v1795 = vadd.f32 %v1789, -1.4531521
    %v1796 = vadd.f32 %v1790, -1.4531521
    %v1797 = vadd.f32 %v1791, -1.4531521
    %v1798 = vadd.f32 %v1792, -1.4531521
    %v1799 = vadd.f32 %v1793, -1.4531521
    %v1800 = vmul.f32 %v1794, %v1782
    %v1801 = vmul.f32 %v1795, %v1783
    %v1802 = vmul.f32 %v1796, %v1784
    %v1803 = vmul.f32 %v1797, %v1785
    %v1804 = vmul.f32 %v1798, %v1786
    %v1805 = vmul.f32 %v1799, %v1787
    %v1806 = vadd.f32 %v1800, 1.4214138
    %v1807 = vadd.f32 %v1801, 1.4214138
    %v1808 = vadd.f32 %v1802, 1.4214138
    %v1809 = vadd.f32 %v1803, 1.4214138
    %v1810 = vadd.f32 %v1804, 1.4214138
    %v1811 = vadd.f32 %v1805, 1.4214138
    %v1812 = vmul.f32 %v1806, %v1782
    %v1813 = vmul.f32 %v1807, %v1783
    %v1814 = vmul.f32 %v1808, %v1784
    %v1815 = vmul.f32 %v1809, %v1785
    %v1816 = vmul.f32 %v1810, %v1786
    %v1817 = vmul.f32 %v1811, %v1787
    %v1818 = vadd.f32 %v1812, -0.28449672
    %v1819 = vadd.f32 %v1813, -0.28449672
    %v1820 = vadd.f32 %v1814, -0.28449672
    %v1821 = vadd.f32 %v1815, -0.28449672
    %v1822 = vadd.f32 %v1816, -0.28449672
    %v1823 = vadd.f32 %v1817, -0.28449672
    %v1824 = vmul.f32 %v1818, %v1782
    %v1825 = vmul.f32 %v1819, %v1783
    %v1826 = vmul.f32 %v1820, %v1784
    %v1827 = vmul.f32 %v1821, %v1785
    %v1828 = vmul.f32 %v1822, %v1786
    %v1829 = vmul.f32 %v1823, %v1787
    %v1830 = vadd.f32 %v1824, 0.2548296
    %v1831 = vadd.f32 %v1825, 0.2548296
    %v1832 = vadd.f32 %v1826, 0.2548296
    %v1833 = vadd.f32 %v1827, 0.2548296
    %v1834 = vadd.f32 %v1828, 0.2548296
    %v1835 = vadd.f32 %v1829, 0.2548296
    %v1836 = vmul.f32 %v1830, %v1782
    %v1837 = vmul.f32 %v1831, %v1783
    %v1838 = vmul.f32 %v1832, %v1784
    %v1839 = vmul.f32 %v1833, %v1785
    %v1840 = vmul.f32 %v1834, %v1786
    %v1841 = vmul.f32 %v1835, %v1787
    %v1842 = vsub.f32 0.0, %v1764
    %v1843 = vsub.f32 0.0, %v1765
    %v1844 = vsub.f32 0.0, %v1766
    %v1845 = vsub.f32 0.0, %v1767
    %v1846 = vsub.f32 0.0, %v1768
    %v1847 = vsub.f32 0.0, %v1769
    %v1848 = vmul.f32 %v1842, %v1764
    %v1849 = vmul.f32 %v1843, %v1765
    %v1850 = vmul.f32 %v1844, %v1766
    %v1851 = vmul.f32 %v1845, %v1767
    %v1852 = vmul.f32 %v1846, %v1768
    %v1853 = vmul.f32 %v1847, %v1769
    %v1854 = vmul.f32 %v1848, 1.442695
    %v1855 = vpow.pop %v1854
    %v1856 = vmul.f32 %v1849, 1.442695
    %v1857 = vpow.pop %v1856
    %v1858 = vmul.f32 %v1850, 1.442695
    %v1859 = vpow.pop %v1858
    %v1860 = vmul.f32 %v1851, 1.442695
    %v1861 = vpow.pop %v1860
    %v1862 = vmul.f32 %v1852, 1.442695
    %v1863 = vpow.pop %v1862
    %v1864 = vmul.f32 %v1853, 1.442695
    %v1865 = vpow.pop %v1864
    %v1866 = vmul.f32 %v1836, %v1855
    %v1867 = vmul.f32 %v1837, %v1857
    %v1868 = vmul.f32 %v1838, %v1859
    %v1869 = vmul.f32 %v1839, %v1861
    %v1870 = vmul.f32 %v1840, %v1863
    %v1871 = vmul.f32 %v1841, %v1865
    %v1872 = vsub.f32 1.0, %v1866
    %v1873 = vsub.f32 1.0, %v1867
    %v1874 = vsub.f32 1.0, %v1868
    %v1875 = vsub.f32 1.0, %v1869
    %v1876 = vsub.f32 1.0, %v1870
    %v1877 = vsub.f32 1.0, %v1871
    %v1878 = vmul.f32 %v1758, %v1872
    %v1879 = vmul.f32 %v1759, %v1873
    %v1880 = vmul.f32 %v1760, %v1874
    %v1881 = vmul.f32 %v1761, %v1875
    %v1882 = vmul.f32 %v1762, %v1876
    %v1883 = vmul.f32 %v1763, %v1877
    %v1884 = vadd.f32 %v1878, 1.0
    %v1885 = vadd.f32 %v1879, 1.0
    %v1886 = vadd.f32 %v1880, 1.0
    %v1887 = vadd.f32 %v1881, 1.0
    %v1888 = vadd.f32 %v1882, 1.0
    %v1889 = vadd.f32 %v1883, 1.0
    %v1890 = vmul.f32 %v1740, %v1884
    %v1891 = vmul.f32 %v1741, %v1885
    %v1892 = vmul.f32 %v1742, %v1886
    %v1893 = vmul.f32 %v1743, %v1887
    %v1894 = vmul.f32 %v1744, %v1888
    %v1895 = vmul.f32 %v1745, %v1889
    %v1896 = vld [vmem:[%s3] sm:$0xff]
    %v1897 = vld [vmem:[%s3 + $0x8] sm:$0xff]
    %v1898 = vld [vmem:[%s3 + $0x10] sm:$0xff]
    %v1899 = vld [vmem:[%s3 + $0x18] sm:$0xff]
    %v1900 = vld [vmem:[%s3 + $0x20] sm:$0xff]
    %v1901 = vld [vmem:[%s3 + $0x28] sm:$0xff]
    %v1902 = vld [vmem:[%s3 + $0x30] sm:$0xff]
    %v1903 = vld [vmem:[%s3 + $0x38] sm:$0xff]
    %v1904 = vld [vmem:[%s3 + $0x40] sm:$0xff]
    %v1905 = vld [vmem:[%s3 + $0x48] sm:$0xff]
    %v1906 = vld [vmem:[%s3 + $0x50] sm:$0xff]
    %v1907 = vld [vmem:[%s3 + $0x58] sm:$0xff]
    %v1908 = vld [vmem:[%s3 + $0x60] sm:$0xff]
    %v1909 = vld [vmem:[%s3 + $0x68] sm:$0xff]
    %v1910 = vld [vmem:[%s3 + $0x70] sm:$0xff]
    %v1911 = vld [vmem:[%s3 + $0x78] sm:$0xff]
    %1912 = vmatprep.subr.mxu0 0.0
    %1913 = vmatpush1.msra.mxu0 %v1896
    %1914 = vmatprep.subr.mxu0 0.0
    %1915 = vmatpush1.msra.mxu0 %v1897
    %1916 = vmatprep.subr.mxu0 0.0
    %1917 = vmatpush1.msra.mxu0 %v1898
    %1918 = vmatprep.subr.mxu0 0.0
    %1919 = vmatpush1.msra.mxu0 %v1899
    %1920 = vmatprep.subr.mxu0 0.0
    %1921 = vmatpush1.msra.mxu0 %v1900
    %1922 = vmatprep.subr.mxu0 0.0
    %1923 = vmatpush1.msra.mxu0 %v1901
    %1924 = vmatprep.subr.mxu0 0.0
    %1925 = vmatpush1.msra.mxu0 %v1902
    %1926 = vmatprep.subr.mxu0 0.0
    %1927 = vmatpush1.msra.mxu0 %v1903
    %1928 = vmatprep.subr.mxu0 0.0
    %1929 = vmatpush1.msra.mxu0 %v1904
    %1930 = vmatprep.subr.mxu0 0.0
    %1931 = vmatpush1.msra.mxu0 %v1905
    %1932 = vmatprep.subr.mxu0 0.0
    %1933 = vmatpush1.msra.mxu0 %v1906
    %1934 = vmatprep.subr.mxu0 0.0
    %1935 = vmatpush1.msra.mxu0 %v1907
    %1936 = vmatprep.subr.mxu0 0.0
    %1937 = vmatpush1.msra.mxu0 %v1908
    %1938 = vmatprep.subr.mxu0 0.0
    %1939 = vmatpush1.msra.mxu0 %v1909
    %1940 = vmatprep.subr.mxu0 0.0
    %1941 = vmatpush1.msra.mxu0 %v1910
    %1942 = vmatprep.subr.mxu0 0.0
    %1943 = vmatpush1.msra.mxu0 %v1911
    %1944 = vmatprep.subr.mxu0 0.0
    %1945 = vmatpush1.msra.mxu0 0.0
    %1946 = vmatprep.subr.mxu0 0.0
    %1947 = vmatpush1.msra.mxu0 0.0
    %1948 = vmatprep.subr.mxu0 0.0
    %1949 = vmatpush1.msra.mxu0 0.0
    %1950 = vmatprep.subr.mxu0 0.0
    %1951 = vmatpush1.msra.mxu0 0.0
    %1952 = vmatprep.subr.mxu0 0.0
    %1953 = vmatpush1.msra.mxu0 0.0
    %1954 = vmatprep.subr.mxu0 0.0
    %1955 = vmatpush1.msra.mxu0 0.0
    %1956 = vmatprep.subr.mxu0 0.0
    %1957 = vmatpush1.msra.mxu0 0.0
    %1958 = vmatprep.subr.mxu0 0.0
    %1959 = vmatpush1.msra.mxu0 0.0
    %1960 = vmatprep.subr.mxu0 0.0
    %1961 = vmatpush1.msra.mxu0 0.0
    %1962 = vmatprep.subr.mxu0 0.0
    %1963 = vmatpush1.msra.mxu0 0.0
    %1964 = vmatprep.subr.mxu0 0.0
    %1965 = vmatpush1.msra.mxu0 0.0
    %1966 = vmatprep.subr.mxu0 0.0
    %1967 = vmatpush1.msra.mxu0 0.0
    %1968 = vmatprep.subr.mxu0 0.0
    %1969 = vmatpush1.msra.mxu0 0.0
    %1970 = vmatprep.subr.mxu0 0.0
    %1971 = vmatpush1.msra.mxu0 0.0
    %1972 = vmatprep.subr.mxu0 0.0
    %1973 = vmatpush1.msra.mxu0 0.0
    %1974 = vmatprep.subr.mxu0 0.0
    %1975 = vmatpush1.msra.mxu0 0.0
    %1976 = vmatprep.mubr.f32.mxu0 0.0
    %1977 = vmatmul.mubr.f32.gmra.mrb[0].mxu0 %v1890
    %v1978 = vpop.f32.mrb[0].mxu0
    %v1979 = vadd.f32 0.0, %v1978
    %v1980 = vpop.f32.mrb[0].mxu0
    %1981 = vmatprep.mubr.f32.mxu0 0.0
    %1982 = vmatmul.mubr.f32.gmra.mrb[0].mxu0 %v1891
    %v1983 = vpop.f32.mrb[0].mxu0
    %v1984 = vadd.f32 0.0, %v1983
    %v1985 = vpop.f32.mrb[0].mxu0
    %1986 = vmatprep.mubr.f32.mxu0 0.0
    %1987 = vmatmul.mubr.f32.gmra.mrb[0].mxu0 %v1892
    %v1988 = vpop.f32.mrb[0].mxu0
    %v1989 = vadd.f32 0.0, %v1988
    %v1990 = vpop.f32.mrb[0].mxu0
    %1991 = vmatprep.mubr.f32.mxu0 0.0
    %1992 = vmatmul.mubr.f32.gmra.mrb[0].mxu0 %v1893
    %v1993 = vpop.f32.mrb[0].mxu0
    %v1994 = vadd.f32 0.0, %v1993
    %v1995 = vpop.f32.mrb[0].mxu0
    %1996 = vmatprep.mubr.f32.mxu0 0.0
    %1997 = vmatmul.mubr.f32.gmra.mrb[0].mxu0 %v1894
    %v1998 = vpop.f32.mrb[0].mxu0
    %v1999 = vadd.f32 0.0, %v1998
    %v2000 = vpop.f32.mrb[0].mxu0
    %2001 = vmatprep.mubr.f32.mxu0 0.0
    %2002 = vmatmul.mubr.f32.gmra.mrb[0].mxu0 %v1895
    %v2003 = vpop.f32.mrb[0].mxu0
    %v2004 = vadd.f32 0.0, %v2003
    %v2005 = vpop.f32.mrb[0].mxu0
    %2006 = vdwg.mxu0
    %v2007 = vadd.f32 %v1507, %v1979
    %v2008 = vadd.f32 %v1508, %v1984
    %v2009 = vadd.f32 %v1509, %v1989
    %v2010 = vadd.f32 %v1510, %v1994
    %v2011 = vadd.f32 %v1511, %v1999
    %v2012 = vadd.f32 %v1512, %v2004
    %v2013 = vlaneseq
    %v2014 = vshrl.u32 %v2013, 7
    %v2015 = vsub.s32 0, %v2014
    %v2016 = vrot.slane %v251, %v2015
    %v2017 = vadd.f32 %v2007, %v2016
    %v2018 = vadd.f32 %v2008, %v2016
    %v2019 = vadd.f32 %v2009, %v2016
    %v2020 = vadd.f32 %v2010, %v2016
    %v2021 = vadd.f32 %v2011, %v2016
    %v2022 = vadd.f32 %v2012, %v2016
    %v2023 = vsel %vm390, %v2017, 0.0
    %2024 = vadd.xlane.f32.xlu0 %v2023
    %v2025 = vpop.xlane.xlu0 %2024
    %v2026 = vsel %vm390, %v2018, 0.0
    %2027 = vadd.xlane.f32.xlu0 %v2026
    %v2028 = vpop.xlane.xlu0 %2027
    %v2029 = vsel %vm390, %v2019, 0.0
    %2030 = vadd.xlane.f32.xlu0 %v2029
    %v2031 = vpop.xlane.xlu0 %2030
    %v2032 = vsel %vm390, %v2020, 0.0
    %2033 = vadd.xlane.f32.xlu0 %v2032
    %v2034 = vpop.xlane.xlu0 %2033
    %v2035 = vsel %vm390, %v2021, 0.0
    %2036 = vadd.xlane.f32.xlu0 %v2035
    %v2037 = vpop.xlane.xlu0 %2036
    %v2038 = vsel %vm390, %v2022, 0.0
    %2039 = vadd.xlane.f32.xlu0 %v2038
    %v2040 = vpop.xlane.xlu0 %2039
    %v2041 = vmul.f32 %v2025, %v409
    %v2042 = vmul.f32 %v2028, %v409
    %v2043 = vmul.f32 %v2031, %v409
    %v2044 = vmul.f32 %v2034, %v409
    %v2045 = vmul.f32 %v2037, %v409
    %v2046 = vmul.f32 %v2040, %v409
    %v2047 = vmul.f32 %v2017, %v2017
    %v2048 = vmul.f32 %v2018, %v2018
    %v2049 = vmul.f32 %v2019, %v2019
    %v2050 = vmul.f32 %v2020, %v2020
    %v2051 = vmul.f32 %v2021, %v2021
    %v2052 = vmul.f32 %v2022, %v2022
    %v2053 = vsel %vm390, %v2047, 0.0
    %2054 = vadd.xlane.f32.xlu0 %v2053
    %v2055 = vpop.xlane.xlu0 %2054
    %v2056 = vsel %vm390, %v2048, 0.0
    %2057 = vadd.xlane.f32.xlu0 %v2056
    %v2058 = vpop.xlane.xlu0 %2057
    %v2059 = vsel %vm390, %v2049, 0.0
    %2060 = vadd.xlane.f32.xlu0 %v2059
    %v2061 = vpop.xlane.xlu0 %2060
    %v2062 = vsel %vm390, %v2050, 0.0
    %2063 = vadd.xlane.f32.xlu0 %v2062
    %v2064 = vpop.xlane.xlu0 %2063
    %v2065 = vsel %vm390, %v2051, 0.0
    %2066 = vadd.xlane.f32.xlu0 %v2065
    %v2067 = vpop.xlane.xlu0 %2066
    %v2068 = vsel %vm390, %v2052, 0.0
    %2069 = vadd.xlane.f32.xlu0 %v2068
    %v2070 = vpop.xlane.xlu0 %2069
    %v2071 = vmul.f32 %v2055, %v409
    %v2072 = vmul.f32 %v2058, %v409
    %v2073 = vmul.f32 %v2061, %v409
    %v2074 = vmul.f32 %v2064, %v409
    %v2075 = vmul.f32 %v2067, %v409
    %v2076 = vmul.f32 %v2070, %v409
    %v2077 = vmul.f32 %v2041, %v2041
    %v2078 = vmul.f32 %v2042, %v2042
    %v2079 = vmul.f32 %v2043, %v2043
    %v2080 = vmul.f32 %v2044, %v2044
    %v2081 = vmul.f32 %v2045, %v2045
    %v2082 = vmul.f32 %v2046, %v2046
    %v2083 = vsub.f32 %v2071, %v2077
    %v2084 = vsub.f32 %v2072, %v2078
    %v2085 = vsub.f32 %v2073, %v2079
    %v2086 = vsub.f32 %v2074, %v2080
    %v2087 = vsub.f32 %v2075, %v2081
    %v2088 = vsub.f32 %v2076, %v2082
    %v2089 = vsub.f32 %v2017, %v2041
    %v2090 = vsub.f32 %v2018, %v2042
    %v2091 = vsub.f32 %v2019, %v2043
    %v2092 = vsub.f32 %v2020, %v2044
    %v2093 = vsub.f32 %v2021, %v2045
    %v2094 = vsub.f32 %v2022, %v2046
    %v2095 = vadd.f32 %v2083, 1e-06
    %v2096 = vadd.f32 %v2084, 1e-06
    %v2097 = vadd.f32 %v2085, 1e-06
    %v2098 = vadd.f32 %v2086, 1e-06
    %v2099 = vadd.f32 %v2087, 1e-06
    %v2100 = vadd.f32 %v2088, 1e-06
    %v2101 = vrsqrt.pop %v2095
    %v2102 = vrsqrt.pop %v2096
    %v2103 = vrsqrt.pop %v2097
    %v2104 = vrsqrt.pop %v2098
    %v2105 = vrsqrt.pop %v2099
    %v2106 = vrsqrt.pop %v2100
    %v2107 = vmul.f32 %v2089, %v2101
    %v2108 = vmul.f32 %v2090, %v2102
    %v2109 = vmul.f32 %v2091, %v2103
    %v2110 = vmul.f32 %v2092, %v2104
    %v2111 = vmul.f32 %v2093, %v2105
    %v2112 = vmul.f32 %v2094, %v2106
    %v2113 = vlaneseq
    %v2114 = vshrl.u32 %v2113, 7
    %v2115 = vsub.s32 4, %v2114
    %v2116 = vrot.slane %v252, %v2115
    %v2117 = vmul.f32 %v2107, %v2116
    %v2118 = vmul.f32 %v2108, %v2116
    %v2119 = vmul.f32 %v2109, %v2116
    %v2120 = vmul.f32 %v2110, %v2116
    %v2121 = vmul.f32 %v2111, %v2116
    %v2122 = vmul.f32 %v2112, %v2116
    %v2123 = vlaneseq
    %v2124 = vshrl.u32 %v2123, 7
    %v2125 = vsub.s32 5, %v2124
    %v2126 = vrot.slane %v252, %v2125
    %v2127 = vadd.f32 %v2117, %v2126
    %v2128 = vadd.f32 %v2118, %v2126
    %v2129 = vadd.f32 %v2119, %v2126
    %v2130 = vadd.f32 %v2120, %v2126
    %v2131 = vadd.f32 %v2121, %v2126
    %v2132 = vadd.f32 %v2122, %v2126
    %v2133 = vmul.f32 %v2127, %v2127
    %v2134 = vmul.f32 %v2128, %v2128
    %v2135 = vmul.f32 %v2129, %v2129
    %v2136 = vsel %vm390, %v2133, 0.0
    %2137 = vadd.xlane.f32.xlu0 %v2136
    %v2138 = vpop.xlane.xlu0 %2137
    %v2139 = vsel %vm390, %v2134, 0.0
    %2140 = vadd.xlane.f32.xlu0 %v2139
    %v2141 = vpop.xlane.xlu0 %2140
    %v2142 = vsel %vm390, %v2135, 0.0
    %2143 = vadd.xlane.f32.xlu0 %v2142
    %v2144 = vpop.xlane.xlu0 %2143
    %v2145 = vadd.f32 %v2138, 1e-12
    %v2146 = vadd.f32 %v2141, 1e-12
    %v2147 = vadd.f32 %v2144, 1e-12
    %v2148 = vrsqrt.pop %v2145
    %v2149 = vrsqrt.pop %v2146
    %v2150 = vrsqrt.pop %v2147
    %v2151 = vmul.f32 %v2130, %v2130
    %v2152 = vmul.f32 %v2131, %v2131
    %v2153 = vmul.f32 %v2132, %v2132
    %v2154 = vsel %vm390, %v2151, 0.0
    %2155 = vadd.xlane.f32.xlu0 %v2154
    %v2156 = vpop.xlane.xlu0 %2155
    %v2157 = vsel %vm390, %v2152, 0.0
    %2158 = vadd.xlane.f32.xlu0 %v2157
    %v2159 = vpop.xlane.xlu0 %2158
    %v2160 = vsel %vm390, %v2153, 0.0
    %2161 = vadd.xlane.f32.xlu0 %v2160
    %v2162 = vpop.xlane.xlu0 %2161
    %v2163 = vadd.f32 %v2156, 1e-12
    %v2164 = vadd.f32 %v2159, 1e-12
    %v2165 = vadd.f32 %v2162, 1e-12
    %v2166 = vrsqrt.pop %v2163
    %v2167 = vrsqrt.pop %v2164
    %v2168 = vrsqrt.pop %v2165
    %v2169 = vmul.f32 %v2127, %v2148
    %v2170 = vmul.f32 %v2128, %v2149
    %v2171 = vmul.f32 %v2129, %v2150
    %v2172 = vmul.f32 %v2130, %v2166
    %v2173 = vmul.f32 %v2131, %v2167
    %v2174 = vmul.f32 %v2132, %v2168
    %v2175 = vmul.f32 %v2169, %v2172
    %v2176 = vmul.f32 %v2170, %v2173
    %v2177 = vmul.f32 %v2171, %v2174
    %v2178 = vsel %vm390, %v2175, 0.0
    %2179 = vadd.xlane.f32.xlu0 %v2178
    %v2180 = vpop.xlane.xlu0 %2179
    %v2181 = vsel %vm390, %v2176, 0.0
    %2182 = vadd.xlane.f32.xlu0 %v2181
    %v2183 = vpop.xlane.xlu0 %2182
    %v2184 = vsel %vm390, %v2177, 0.0
    %2185 = vadd.xlane.f32.xlu0 %v2184
    %v2186 = vpop.xlane.xlu0 %2185
    %vm2187 = vcmp.lt.s32.totalorder %v22, 17
    %vm2188 = vcmp.lt.s32.totalorder %v23, 17
    %vm2189 = vcmp.lt.s32.totalorder %v24, 17
    %v2190 = vsel %vm2187, 1, 0
    %v2191 = vsel %vm2188, 1, 0
    %v2192 = vsel %vm2189, 1, 0
    %v2193 = vcvt.s32.f32 %v2190
    %v2194 = vcvt.s32.f32 %v2191
    %v2195 = vcvt.s32.f32 %v2192
    %v2196 = vmul.f32 %v2180, %v2193
    %v2197 = vmul.f32 %v2183, %v2194
    %v2198 = vmul.f32 %v2186, %v2195
    %vm2199 = vcmask 7168
    %v2200 = vsel %vm2199, %v2196, 0.0
    %v2201 = vsel %vm2199, %v2197, 0.0
    %v2202 = vadd.f32 %v2200, %v2201
    %v2203 = vsel %vm2199, %v2198, 0.0
    %v2204 = vadd.f32 %v2202, %v2203
    %2205 = vadd.xlane.f32.xlu0 %v2204
    %v2206 = vpop.xlane.xlu0 %2205
    %v2207 = vrot.slane %v2206, 4
    %v2208 = vadd.f32 %v2206, %v2207
    %v2209 = vrot.slane %v2208, 2
    %v2210 = vadd.f32 %v2208, %v2209
    %v2211 = vrot.slane %v2210, 1
    %v2212 = vadd.f32 %v2210, %v2211
    %s2213 = vtos %v2212
    %s2214 = smul.f32 %s2213, 0.05882353
    %s2215 = sadd.f32 %s2214, 1.0
    %s2216 = smul.f32 %s2215, 0.5
    %v2217 = vstv %s2216
    %vm2218 = vcmask 0
    %2219 = vst.msk [vmem:[#allocation2] sm:$0x1] %vm2218, %v2217
    // Predicated region
    $region22: #{dino_similarity.1} parent=1 // pred_check
      _
    $region23: #{dino_similarity.1} parent=1 // pred_check_branch
      %2221 = sbr.rel (0) target = $region25
    $region24: #{dino_similarity.1} parent=1 // pred_region
      %s2223 = ssub.s32 16, 16
      %2224 = vsyncadd [#allocation3], %s2223
      %s2226 = sshll.u32 [#allocation2], 4
      %s2227 = int_to_ptr.vmem [resolvable:$true] %s2226
      %2229 = dma.vmem_to_hbm [thread:$0]  %s2227, 16, %s5, [#allocation3]
    $region25: #{dino_similarity.1} parent=1 // pred_fallthru
      _
    // Predicated region
    $region26: #{dino_similarity.1} parent=1 // pred_check
      _
    $region27: #{dino_similarity.1} parent=1 // pred_check_branch
      %2231 = sbr.rel (0) target = $region29
    $region28: #{dino_similarity.1} parent=1 // pred_region
      %2232 = dma.done [#allocation3], 16
    $region29: #{dino_similarity.1} parent=1 // pred_fallthru
      _
    %2233 = vsyncpa [#allocation3], 1

</llo_original>
